<compile_context>
chip_gen: v7x
topology: tpu7x:2x2x1
jax: 0.10.0
libtpu: 0.0.40
codegen_flags: <defaults>
</compile_context>

<pallas_src>
import math
from functools import partial

import jax
import jax.numpy as jnp
from jax import lax
from jax.experimental import pallas as pl
from jax.experimental.pallas import tpu as pltpu


# ---------------------------------------------------------------------------
# In-kernel helpers (all f32)
# ---------------------------------------------------------------------------
def _erf(x):
    # Abramowitz & Stegun 7.1.26 (|err| < 1.5e-7); odd symmetry via one select.
    p = 0.3275911
    a1, a2, a3, a4, a5 = (0.254829592, -0.284496736, 1.421413741,
                          -1.453152027, 1.061405429)
    ax = jnp.abs(x)
    t = 1.0 / (1.0 + p * ax)
    poly = ((((a5 * t + a4) * t + a3) * t + a2) * t + a1) * t
    e = 1.0 - poly * jnp.exp(-ax * ax)
    return jnp.where(x < 0.0, -e, e)


def _gelu_exact(x):
    return 0.5 * x * (1.0 + _erf(x * (1.0 / math.sqrt(2.0))))


def _layernorm(x, gamma, beta, eps=1e-5):
    mean = jnp.mean(x, axis=-1, keepdims=True)
    var = jnp.mean((x - mean) ** 2, axis=-1, keepdims=True)
    inv = lax.rsqrt(var + eps)           # EUP
    return (x - mean) * inv * gamma + beta


# ---------------------------------------------------------------------------
# Kernel: one batch element (S, D) per grid step.
# ---------------------------------------------------------------------------
def _encoder_layer_kernel(x_ref, wqkvT_ref, wzT_ref, bz_ref, gamma_ref,
                          beta_ref, w1T_ref, b1_ref, w2T_ref, b2_ref,
                          o_ref, *, num_heads, dim, compute_dtype):
    d = dim
    cdt = compute_dtype                  # MXU operand dtype (bf16 or f32)
    x = x_ref[...]                       # (S, D) f32, one batch element
    gamma = gamma_ref[...]               # (1, D) f32
    beta = beta_ref[...]                 # (1, D) f32

    # Fused K/Q/V projection for all heads (Q columns pre-scaled by 1/sqrt(d)
    # in the wrapper).  f32 accumulate.
    qkv = jnp.dot(x.astype(cdt), wqkvT_ref[...],
                  preferred_element_type=jnp.float32)       # (S, 3*H*D)

    mha = None
    for h in range(num_heads):           # static unroll, small H
        base = 3 * h * d
        kx = qkv[:, base:base + d]
        qx = qkv[:, base + d:base + 2 * d]       # already carries 1/sqrt(d)
        vx = qkv[:, base + 2 * d:base + 3 * d]

        # scores = K(x) @ Q(x)^T (contract shared feature axis, trans-B path).
        scores = lax.dot_general(kx.astype(cdt), qx.astype(cdt),
                                 (((1,), (1,)), ((), ())),
                                 preferred_element_type=jnp.float32)  # (S, S)
        scores = scores - jnp.max(scores, axis=-1, keepdims=True)     # f32
        e = jnp.exp(scores)                                           # f32
        denom = jnp.sum(e, axis=-1, keepdims=True)                    # (S, 1)

        # Deferred softmax normalization: P@V first, then one (S, D) multiply.
        head = jnp.dot(e.astype(cdt), vx.astype(cdt),
                       preferred_element_type=jnp.float32)            # (S, D)
        head = head * pl.reciprocal(denom, approx=False)

        # Accumulate through Wz per head: no lane-axis concat / relayout.
        contrib = jnp.dot(head.astype(cdt), wzT_ref[h],
                          preferred_element_type=jnp.float32)
        mha = contrib if mha is None else mha + contrib
    mha = mha + bz_ref[...]

    out1 = _layernorm(x + mha, gamma, beta)                  # residual + LN

    h1 = jnp.dot(out1.astype(cdt), w1T_ref[...],
                 preferred_element_type=jnp.float32) + b1_ref[...]
    h1 = _gelu_exact(h1)                                     # f32
    h2 = jnp.dot(h1.astype(cdt), w2T_ref[...],
                 preferred_element_type=jnp.float32) + b2_ref[...]

    o_ref[...] = _layernorm(out1 + h2, gamma, beta)          # residual + LN


# ---------------------------------------------------------------------------
# Wrapper
# ---------------------------------------------------------------------------
def encoder_layer(x, params, compute_dtype=jnp.bfloat16):
    B, S, D = x.shape
    H = params["wk"].shape[0]
    F = params["w1"].shape[0]
    cdt = compute_dtype
    scale = 1.0 / math.sqrt(D)

    # ----- weight prep (HBM-side constant folds only) -----
    qkv_blocks = []
    for h in range(H):                   # per-head [K, Q*scale, V] column blocks
        qkv_blocks += [params["wk"][h].T,
                       params["wq"][h].T * scale,    # fold 1/sqrt(d) into Q
                       params["wv"][h].T]
    wqkvT = jnp.concatenate(qkv_blocks, axis=1).astype(cdt)   # (D, 3*H*D)
    wzT = params["wz"].T.reshape(H, D, D).astype(cdt)         # per-head Wz^T
    w1T = params["w1"].T.astype(cdt)                          # (D, F)
    w2T = params["w2"].T.astype(cdt)                          # (F, D)
    bz = params["bz"].reshape(1, D).astype(jnp.float32)
    b1 = params["b1"].reshape(1, F).astype(jnp.float32)
    b2 = params["b2"].reshape(1, D).astype(jnp.float32)
    gamma = params["gamma"].reshape(1, D).astype(jnp.float32)
    beta = params["beta"].reshape(1, D).astype(jnp.float32)

    kern = partial(_encoder_layer_kernel, num_heads=H, dim=D,
                   compute_dtype=cdt)

    def const_spec(arr):
        # Whole-array block with a constant index map: DMA'd once, reused
        # across all grid steps (no per-step re-fetch of weights).
        nd = arr.ndim
        return pl.BlockSpec(arr.shape, lambda b, _nd=nd: (0,) * _nd)

    out = pl.pallas_call(
        kern,
        grid=(B,),
        in_specs=[
            pl.BlockSpec((None, S, D), lambda b: (b, 0, 0)),   # x, per-batch
            const_spec(wqkvT),
            const_spec(wzT),
            const_spec(bz),
            const_spec(gamma),
            const_spec(beta),
            const_spec(w1T),
            const_spec(b1),
            const_spec(w2T),
            const_spec(b2),
        ],
        out_specs=pl.BlockSpec((None, S, D), lambda b: (b, 0, 0)),
        out_shape=jax.ShapeDtypeStruct((B, S, D), jnp.float32),
        compiler_params=pltpu.CompilerParams(
            # Batch axis is independent -> shard across v7x's 2 TensorCores.
            dimension_semantics=("parallel",),
            # Tiny footprint here; at real shapes size this to the resident
            # weights + activation tiles and budget against 64 MiB on v7x.
            vmem_limit_bytes=32 * 1024 * 1024,
        ),
    )(x, wqkvT, wzT, bz, gamma, beta, w1T, b1, w2T, b2)
    return out


# ---------------------------------------------------------------------------
# Pure-JAX reference (mirrors the PyTorch EncoderLayer forward exactly)
# ---------------------------------------------------------------------------
def ref_forward(x, params):
    D = x.shape[-1]
    H = params["wk"].shape[0]
    outs = []
    for h in range(H):
        kx = x @ params["wk"][h].T
        qx = x @ params["wq"][h].T
        vx = x @ params["wv"][h].T
        scores = (kx @ jnp.swapaxes(qx, -1, -2)) / jnp.sqrt(jnp.float32(D))
        att = jax.nn.softmax(scores, axis=-1)
        outs.append(att @ vx)
    cat = jnp.concatenate(outs, axis=-1)
    mha = cat @ params["wz"].T + params["bz"]

    def ln(y):
        m = y.mean(-1, keepdims=True)
        v = ((y - m) ** 2).mean(-1, keepdims=True)
        return (y - m) / jnp.sqrt(v + 1e-5) * params["gamma"] + params["beta"]

    out = ln(x + mha)
    ffo = jax.nn.gelu(out @ params["w1"].T + params["b1"], approximate=False)
    ffo = ffo @ params["w2"].T + params["b2"]
    return ln(out + ffo)


# ---------------------------------------------------------------------------
if __name__ == "__main__":
    # Small, module-consistent shapes.
    B, S, D = 2, 8, 32        # batch, seq, dim
    H = 2                     # num_heads
    F = 64                    # ff_size
    # NOTE: `head_size` is an unused constructor arg in the PyTorch module.

    key = jax.random.PRNGKey(0)
    ks = jax.random.split(key, 10)
    params = {
        "wk": 0.1 * jax.random.normal(ks[0], (H, D, D), jnp.float32),
        "wq": 0.1 * jax.random.normal(ks[1], (H, D, D), jnp.float32),
        "wv": 0.1 * jax.random.normal(ks[2], (H, D, D), jnp.float32),
        "wz": 0.1 * jax.random.normal(ks[3], (D, H * D), jnp.float32),
        "bz": 0.1 * jax.random.normal(ks[4], (D,), jnp.float32),
        "gamma": jnp.ones((D,), jnp.float32),
        "beta": jnp.zeros((D,), jnp.float32),
        "w1": 0.1 * jax.random.normal(ks[5], (F, D), jnp.float32),
        "b1": 0.1 * jax.random.normal(ks[6], (F,), jnp.float32),
        "w2": 0.1 * jax.random.normal(ks[7], (D, F), jnp.float32),
        "b2": 0.1 * jax.random.normal(ks[8], (D,), jnp.float32),
    }
    x = jax.random.normal(ks[9], (B, S, D), jnp.float32)

    ref = ref_forward(x, params)

    # f32 MXU-operand path: tight check against the f32 reference.
    out_f32 = jax.block_until_ready(encoder_layer(x, params, jnp.float32))
    assert out_f32.shape == (B, S, D)
    err_f32 = jnp.max(jnp.abs(out_f32 - ref))
    assert jnp.allclose(out_f32, ref, atol=1e-4, rtol=1e-4), (
        f"f32 path max abs err {err_f32}")

    # bf16 MXU-operand path (native-rate MXU), f32 accumulate/softmax/LN/GELU.
    out_bf16 = jax.block_until_ready(encoder_layer(x, params, jnp.bfloat16))
    err_bf16 = jnp.max(jnp.abs(out_bf16 - ref))
    assert jnp.allclose(out_bf16, ref, atol=6e-2, rtol=6e-2), (
        f"bf16 path max abs err {err_bf16}")

    print("KERNEL_OK")
</pallas_src>

<mosaic_0001>
module attributes {stable_mosaic.version = 11 : i64} {
  func.func @_encoder_layer_kernel(%arg0: i32, %arg1: memref<1x8x32xf32, #tpu.memory_space<vmem>>, %arg2: memref<32x192xf32, #tpu.memory_space<vmem>>, %arg3: memref<2x32x32xf32, #tpu.memory_space<vmem>>, %arg4: memref<1x32xf32, #tpu.memory_space<vmem>>, %arg5: memref<1x32xf32, #tpu.memory_space<vmem>>, %arg6: memref<1x32xf32, #tpu.memory_space<vmem>>, %arg7: memref<32x64xf32, #tpu.memory_space<vmem>>, %arg8: memref<1x64xf32, #tpu.memory_space<vmem>>, %arg9: memref<64x32xf32, #tpu.memory_space<vmem>>, %arg10: memref<1x32xf32, #tpu.memory_space<vmem>>, %arg11: memref<1x8x32xf32, #tpu.memory_space<vmem>>) attributes {dimension_semantics = [#tpu.dimension_semantics<parallel>], iteration_bounds = array<i64: 2>, scalar_prefetch = 0 : i64, scratch_operands = 0 : i64, tpu.core_type = #tpu.core_type<tc>, window_params = [{transform_indices = @transform_0, window_bounds = array<i64: 1, 8, 32>}, {pipeline_mode = #tpu.pipeline_mode<synchronous>, transform_indices = @transform_1, window_bounds = array<i64: 32, 192>}, {pipeline_mode = #tpu.pipeline_mode<synchronous>, transform_indices = @transform_2, window_bounds = array<i64: 2, 32, 32>}, {pipeline_mode = #tpu.pipeline_mode<synchronous>, transform_indices = @transform_3, window_bounds = array<i64: 1, 32>}, {pipeline_mode = #tpu.pipeline_mode<synchronous>, transform_indices = @transform_4, window_bounds = array<i64: 1, 32>}, {pipeline_mode = #tpu.pipeline_mode<synchronous>, transform_indices = @transform_5, window_bounds = array<i64: 1, 32>}, {pipeline_mode = #tpu.pipeline_mode<synchronous>, transform_indices = @transform_6, window_bounds = array<i64: 32, 64>}, {pipeline_mode = #tpu.pipeline_mode<synchronous>, transform_indices = @transform_7, window_bounds = array<i64: 1, 64>}, {pipeline_mode = #tpu.pipeline_mode<synchronous>, transform_indices = @transform_8, window_bounds = array<i64: 64, 32>}, {pipeline_mode = #tpu.pipeline_mode<synchronous>, transform_indices = @transform_9, window_bounds = array<i64: 1, 32>}, {transform_indices = @transform_10, window_bounds = array<i64: 1, 8, 32>}]} {
    %c0 = arith.constant 0 : index
    %c0_0 = arith.constant 0 : index
    %c0_1 = arith.constant 0 : index
    %0 = vector.load %arg1[%c0, %c0_0, %c0_1] : memref<1x8x32xf32, #tpu.memory_space<vmem>>, vector<1x8x32xf32>
    %1 = vector.shape_cast %0 : vector<1x8x32xf32> to vector<8x32xf32>
    %c0_2 = arith.constant 0 : index
    %c0_3 = arith.constant 0 : index
    %2 = vector.load %arg5[%c0_2, %c0_3] : memref<1x32xf32, #tpu.memory_space<vmem>>, vector<1x32xf32>
    %c0_4 = arith.constant 0 : index
    %c0_5 = arith.constant 0 : index
    %3 = vector.load %arg6[%c0_4, %c0_5] : memref<1x32xf32, #tpu.memory_space<vmem>>, vector<1x32xf32>
    %c0_6 = arith.constant 0 : index
    %c0_7 = arith.constant 0 : index
    %4 = vector.load %arg2[%c0_6, %c0_7] : memref<32x192xf32, #tpu.memory_space<vmem>>, vector<32x192xf32>
    %cst = arith.constant dense<0.000000e+00> : vector<8x192xf32>
    %5 = tpu.matmul %1, %4, %cst {dimension_numbers = #tpu.dot_dimension_numbers<[1], [0], [0], [1], [0, 0, 1, 1], [], []>} : vector<8x32xf32>, vector<32x192xf32>, vector<8x192xf32> -> vector<8x192xf32>
    %6 = vector.extract_strided_slice %5 {offsets = [0, 0], sizes = [8, 32], strides = [1, 1]} : vector<8x192xf32> to vector<8x32xf32>
    %7 = vector.extract_strided_slice %5 {offsets = [0, 32], sizes = [8, 32], strides = [1, 1]} : vector<8x192xf32> to vector<8x32xf32>
    %8 = vector.extract_strided_slice %5 {offsets = [0, 64], sizes = [8, 32], strides = [1, 1]} : vector<8x192xf32> to vector<8x32xf32>
    %cst_8 = arith.constant dense<0.000000e+00> : vector<8x8xf32>
    %9 = tpu.matmul %6, %7, %cst_8 {dimension_numbers = #tpu.dot_dimension_numbers<[1], [1], [0], [0], [0, 0, 1, 0], [], []>} : vector<8x32xf32>, vector<8x32xf32>, vector<8x8xf32> -> vector<8x8xf32>
    %cst_9 = arith.constant dense<0xFF800000> : vector<8xf32>
    %10 = vector.multi_reduction <maximumf>, %9, %cst_9 [1] : vector<8x8xf32> to vector<8xf32>
    %11 = vector.shape_cast %10 : vector<8xf32> to vector<8x1xf32>
    %12 = vector.broadcast %11 : vector<8x1xf32> to vector<8x8xf32>
    %13 = arith.subf %9, %12 : vector<8x8xf32>
    %14 = math.exp %13 : vector<8x8xf32>
    %cst_10 = arith.constant dense<0.000000e+00> : vector<8xf32>
    %15 = vector.multi_reduction <add>, %14, %cst_10 [1] : vector<8x8xf32> to vector<8xf32>
    %16 = vector.shape_cast %15 : vector<8xf32> to vector<8x1xf32>
    %cst_11 = arith.constant dense<0.000000e+00> : vector<8x32xf32>
    %17 = tpu.matmul %14, %8, %cst_11 {dimension_numbers = #tpu.dot_dimension_numbers<[1], [0], [0], [1], [0, 0, 1, 1], [], []>} : vector<8x8xf32>, vector<8x32xf32>, vector<8x32xf32> -> vector<8x32xf32>
    %18 = tpu.reciprocal %16 : vector<8x1xf32> -> vector<8x1xf32>
    %19 = vector.broadcast %18 : vector<8x1xf32> to vector<8x32xf32>
    %20 = arith.mulf %17, %19 : vector<8x32xf32>
    %c0_12 = arith.constant 0 : index
    %c0_13 = arith.constant 0 : index
    %c0_14 = arith.constant 0 : index
    %21 = vector.load %arg3[%c0_12, %c0_13, %c0_14] : memref<2x32x32xf32, #tpu.memory_space<vmem>>, vector<1x32x32xf32>
    %22 = vector.shape_cast %21 : vector<1x32x32xf32> to vector<32x32xf32>
    %cst_15 = arith.constant dense<0.000000e+00> : vector<8x32xf32>
    %23 = tpu.matmul %20, %22, %cst_15 {dimension_numbers = #tpu.dot_dimension_numbers<[1], [0], [0], [1], [0, 0, 1, 1], [], []>} : vector<8x32xf32>, vector<32x32xf32>, vector<8x32xf32> -> vector<8x32xf32>
    %24 = vector.extract_strided_slice %5 {offsets = [0, 96], sizes = [8, 32], strides = [1, 1]} : vector<8x192xf32> to vector<8x32xf32>
    %25 = vector.extract_strided_slice %5 {offsets = [0, 128], sizes = [8, 32], strides = [1, 1]} : vector<8x192xf32> to vector<8x32xf32>
    %26 = vector.extract_strided_slice %5 {offsets = [0, 160], sizes = [8, 32], strides = [1, 1]} : vector<8x192xf32> to vector<8x32xf32>
    %cst_16 = arith.constant dense<0.000000e+00> : vector<8x8xf32>
    %27 = tpu.matmul %24, %25, %cst_16 {dimension_numbers = #tpu.dot_dimension_numbers<[1], [1], [0], [0], [0, 0, 1, 0], [], []>} : vector<8x32xf32>, vector<8x32xf32>, vector<8x8xf32> -> vector<8x8xf32>
    %cst_17 = arith.constant dense<0xFF800000> : vector<8xf32>
    %28 = vector.multi_reduction <maximumf>, %27, %cst_17 [1] : vector<8x8xf32> to vector<8xf32>
    %29 = vector.shape_cast %28 : vector<8xf32> to vector<8x1xf32>
    %30 = vector.broadcast %29 : vector<8x1xf32> to vector<8x8xf32>
    %31 = arith.subf %27, %30 : vector<8x8xf32>
    %32 = math.exp %31 : vector<8x8xf32>
    %cst_18 = arith.constant dense<0.000000e+00> : vector<8xf32>
    %33 = vector.multi_reduction <add>, %32, %cst_18 [1] : vector<8x8xf32> to vector<8xf32>
    %34 = vector.shape_cast %33 : vector<8xf32> to vector<8x1xf32>
    %cst_19 = arith.constant dense<0.000000e+00> : vector<8x32xf32>
    %35 = tpu.matmul %32, %26, %cst_19 {dimension_numbers = #tpu.dot_dimension_numbers<[1], [0], [0], [1], [0, 0, 1, 1], [], []>} : vector<8x8xf32>, vector<8x32xf32>, vector<8x32xf32> -> vector<8x32xf32>
    %36 = tpu.reciprocal %34 : vector<8x1xf32> -> vector<8x1xf32>
    %37 = vector.broadcast %36 : vector<8x1xf32> to vector<8x32xf32>
    %38 = arith.mulf %35, %37 : vector<8x32xf32>
    %c1 = arith.constant 1 : index
    %c0_20 = arith.constant 0 : index
    %c0_21 = arith.constant 0 : index
    %39 = vector.load %arg3[%c1, %c0_20, %c0_21] : memref<2x32x32xf32, #tpu.memory_space<vmem>>, vector<1x32x32xf32>
    %40 = vector.shape_cast %39 : vector<1x32x32xf32> to vector<32x32xf32>
    %cst_22 = arith.constant dense<0.000000e+00> : vector<8x32xf32>
    %41 = tpu.matmul %38, %40, %cst_22 {dimension_numbers = #tpu.dot_dimension_numbers<[1], [0], [0], [1], [0, 0, 1, 1], [], []>} : vector<8x32xf32>, vector<32x32xf32>, vector<8x32xf32> -> vector<8x32xf32>
    %42 = arith.addf %23, %41 : vector<8x32xf32>
    %c0_23 = arith.constant 0 : index
    %c0_24 = arith.constant 0 : index
    %43 = vector.load %arg4[%c0_23, %c0_24] : memref<1x32xf32, #tpu.memory_space<vmem>>, vector<1x32xf32>
    %44 = vector.broadcast %43 : vector<1x32xf32> to vector<8x32xf32>
    %45 = arith.addf %42, %44 : vector<8x32xf32>
    %46 = arith.addf %1, %45 : vector<8x32xf32>
    %cst_25 = arith.constant dense<0.000000e+00> : vector<8xf32>
    %47 = vector.multi_reduction <add>, %46, %cst_25 [1] : vector<8x32xf32> to vector<8xf32>
    %48 = vector.shape_cast %47 : vector<8xf32> to vector<8x1xf32>
    %cst_26 = arith.constant 3.200000e+01 : f32
    %49 = vector.broadcast %cst_26 : f32 to vector<8x1xf32>
    %50 = arith.divf %48, %49 : vector<8x1xf32>
    %51 = vector.broadcast %50 : vector<8x1xf32> to vector<8x32xf32>
    %52 = arith.subf %46, %51 : vector<8x32xf32>
    %53 = arith.mulf %52, %52 : vector<8x32xf32>
    %cst_27 = arith.constant dense<0.000000e+00> : vector<8xf32>
    %54 = vector.multi_reduction <add>, %53, %cst_27 [1] : vector<8x32xf32> to vector<8xf32>
    %55 = vector.shape_cast %54 : vector<8xf32> to vector<8x1xf32>
    %cst_28 = arith.constant 3.200000e+01 : f32
    %56 = vector.broadcast %cst_28 : f32 to vector<8x1xf32>
    %57 = arith.divf %55, %56 : vector<8x1xf32>
    %cst_29 = arith.constant 9.99999974E-6 : f32
    %58 = vector.broadcast %cst_29 : f32 to vector<8x1xf32>
    %59 = arith.addf %57, %58 : vector<8x1xf32>
    %60 = math.rsqrt %59 : vector<8x1xf32>
    %61 = vector.broadcast %50 : vector<8x1xf32> to vector<8x32xf32>
    %62 = arith.subf %46, %61 : vector<8x32xf32>
    %63 = vector.broadcast %60 : vector<8x1xf32> to vector<8x32xf32>
    %64 = arith.mulf %62, %63 : vector<8x32xf32>
    %65 = vector.broadcast %2 : vector<1x32xf32> to vector<8x32xf32>
    %66 = arith.mulf %64, %65 : vector<8x32xf32>
    %67 = vector.broadcast %3 : vector<1x32xf32> to vector<8x32xf32>
    %68 = arith.addf %66, %67 : vector<8x32xf32>
    %c0_30 = arith.constant 0 : index
    %c0_31 = arith.constant 0 : index
    %69 = vector.load %arg7[%c0_30, %c0_31] : memref<32x64xf32, #tpu.memory_space<vmem>>, vector<32x64xf32>
    %cst_32 = arith.constant dense<0.000000e+00> : vector<8x64xf32>
    %70 = tpu.matmul %68, %69, %cst_32 {dimension_numbers = #tpu.dot_dimension_numbers<[1], [0], [0], [1], [0, 0, 1, 1], [], []>} : vector<8x32xf32>, vector<32x64xf32>, vector<8x64xf32> -> vector<8x64xf32>
    %c0_33 = arith.constant 0 : index
    %c0_34 = arith.constant 0 : index
    %71 = vector.load %arg8[%c0_33, %c0_34] : memref<1x64xf32, #tpu.memory_space<vmem>>, vector<1x64xf32>
    %72 = vector.broadcast %71 : vector<1x64xf32> to vector<8x64xf32>
    %73 = arith.addf %70, %72 : vector<8x64xf32>
    %cst_35 = arith.constant 5.000000e-01 : f32
    %74 = vector.broadcast %cst_35 : f32 to vector<8x64xf32>
    %75 = arith.mulf %74, %73 : vector<8x64xf32>
    %cst_36 = arith.constant 0.707106769 : f32
    %76 = vector.broadcast %cst_36 : f32 to vector<8x64xf32>
    %77 = arith.mulf %73, %76 : vector<8x64xf32>
    %78 = math.absf %77 : vector<8x64xf32>
    %cst_37 = arith.constant 0.327591091 : f32
    %79 = vector.broadcast %cst_37 : f32 to vector<8x64xf32>
    %80 = arith.mulf %79, %78 : vector<8x64xf32>
    %cst_38 = arith.constant 1.000000e+00 : f32
    %81 = vector.broadcast %cst_38 : f32 to vector<8x64xf32>
    %82 = arith.addf %81, %80 : vector<8x64xf32>
    %cst_39 = arith.constant 1.000000e+00 : f32
    %83 = vector.broadcast %cst_39 : f32 to vector<8x64xf32>
    %84 = arith.divf %83, %82 : vector<8x64xf32>
    %cst_40 = arith.constant 1.06140542 : f32
    %85 = vector.broadcast %cst_40 : f32 to vector<8x64xf32>
    %86 = arith.mulf %85, %84 : vector<8x64xf32>
    %cst_41 = arith.constant -1.45315206 : f32
    %87 = vector.broadcast %cst_41 : f32 to vector<8x64xf32>
    %88 = arith.addf %86, %87 : vector<8x64xf32>
    %89 = arith.mulf %88, %84 : vector<8x64xf32>
    %cst_42 = arith.constant 1.42141378 : f32
    %90 = vector.broadcast %cst_42 : f32 to vector<8x64xf32>
    %91 = arith.addf %89, %90 : vector<8x64xf32>
    %92 = arith.mulf %91, %84 : vector<8x64xf32>
    %cst_43 = arith.constant -0.284496725 : f32
    %93 = vector.broadcast %cst_43 : f32 to vector<8x64xf32>
    %94 = arith.addf %92, %93 : vector<8x64xf32>
    %95 = arith.mulf %94, %84 : vector<8x64xf32>
    %cst_44 = arith.constant 0.254829586 : f32
    %96 = vector.broadcast %cst_44 : f32 to vector<8x64xf32>
    %97 = arith.addf %95, %96 : vector<8x64xf32>
    %98 = arith.mulf %97, %84 : vector<8x64xf32>
    %cst_45 = arith.constant 0.000000e+00 : f32
    %99 = vector.broadcast %cst_45 : f32 to vector<8x64xf32>
    %100 = arith.subf %99, %78 : vector<8x64xf32>
    %101 = arith.mulf %100, %78 : vector<8x64xf32>
    %102 = math.exp %101 : vector<8x64xf32>
    %103 = arith.mulf %98, %102 : vector<8x64xf32>
    %cst_46 = arith.constant 1.000000e+00 : f32
    %104 = vector.broadcast %cst_46 : f32 to vector<8x64xf32>
    %105 = arith.subf %104, %103 : vector<8x64xf32>
    %cst_47 = arith.constant 0.000000e+00 : f32
    %106 = vector.broadcast %cst_47 : f32 to vector<8x64xf32>
    %107 = arith.cmpf olt, %77, %106 : vector<8x64xf32>
    %cst_48 = arith.constant 0.000000e+00 : f32
    %108 = vector.broadcast %cst_48 : f32 to vector<8x64xf32>
    %109 = arith.subf %108, %105 : vector<8x64xf32>
    %110 = arith.select %107, %109, %105 : vector<8x64xi1>, vector<8x64xf32>
    %cst_49 = arith.constant 1.000000e+00 : f32
    %111 = vector.broadcast %cst_49 : f32 to vector<8x64xf32>
    %112 = arith.addf %111, %110 : vector<8x64xf32>
    %113 = arith.mulf %75, %112 : vector<8x64xf32>
    %c0_50 = arith.constant 0 : index
    %c0_51 = arith.constant 0 : index
    %114 = vector.load %arg9[%c0_50, %c0_51] : memref<64x32xf32, #tpu.memory_space<vmem>>, vector<64x32xf32>
    %cst_52 = arith.constant dense<0.000000e+00> : vector<8x32xf32>
    %115 = tpu.matmul %113, %114, %cst_52 {dimension_numbers = #tpu.dot_dimension_numbers<[1], [0], [0], [1], [0, 0, 1, 1], [], []>} : vector<8x64xf32>, vector<64x32xf32>, vector<8x32xf32> -> vector<8x32xf32>
    %c0_53 = arith.constant 0 : index
    %c0_54 = arith.constant 0 : index
    %116 = vector.load %arg10[%c0_53, %c0_54] : memref<1x32xf32, #tpu.memory_space<vmem>>, vector<1x32xf32>
    %117 = vector.broadcast %116 : vector<1x32xf32> to vector<8x32xf32>
    %118 = arith.addf %115, %117 : vector<8x32xf32>
    %119 = arith.addf %68, %118 : vector<8x32xf32>
    %cst_55 = arith.constant dense<0.000000e+00> : vector<8xf32>
    %120 = vector.multi_reduction <add>, %119, %cst_55 [1] : vector<8x32xf32> to vector<8xf32>
    %121 = vector.shape_cast %120 : vector<8xf32> to vector<8x1xf32>
    %cst_56 = arith.constant 3.200000e+01 : f32
    %122 = vector.broadcast %cst_56 : f32 to vector<8x1xf32>
    %123 = arith.divf %121, %122 : vector<8x1xf32>
    %124 = vector.broadcast %123 : vector<8x1xf32> to vector<8x32xf32>
    %125 = arith.subf %119, %124 : vector<8x32xf32>
    %126 = arith.mulf %125, %125 : vector<8x32xf32>
    %cst_57 = arith.constant dense<0.000000e+00> : vector<8xf32>
    %127 = vector.multi_reduction <add>, %126, %cst_57 [1] : vector<8x32xf32> to vector<8xf32>
    %128 = vector.shape_cast %127 : vector<8xf32> to vector<8x1xf32>
    %cst_58 = arith.constant 3.200000e+01 : f32
    %129 = vector.broadcast %cst_58 : f32 to vector<8x1xf32>
    %130 = arith.divf %128, %129 : vector<8x1xf32>
    %cst_59 = arith.constant 9.99999974E-6 : f32
    %131 = vector.broadcast %cst_59 : f32 to vector<8x1xf32>
    %132 = arith.addf %130, %131 : vector<8x1xf32>
    %133 = math.rsqrt %132 : vector<8x1xf32>
    %134 = vector.broadcast %123 : vector<8x1xf32> to vector<8x32xf32>
    %135 = arith.subf %119, %134 : vector<8x32xf32>
    %136 = vector.broadcast %133 : vector<8x1xf32> to vector<8x32xf32>
    %137 = arith.mulf %135, %136 : vector<8x32xf32>
    %138 = vector.broadcast %2 : vector<1x32xf32> to vector<8x32xf32>
    %139 = arith.mulf %137, %138 : vector<8x32xf32>
    %140 = vector.broadcast %3 : vector<1x32xf32> to vector<8x32xf32>
    %141 = arith.addf %139, %140 : vector<8x32xf32>
    %c0_60 = arith.constant 0 : index
    %c0_61 = arith.constant 0 : index
    %c0_62 = arith.constant 0 : index
    %142 = vector.load %arg11[%c0_60, %c0_61, %c0_62] : memref<1x8x32xf32, #tpu.memory_space<vmem>>, vector<1x8x32xf32>
    %143 = vector.shape_cast %142 : vector<1x8x32xf32> to vector<8x32xf32>
    %144 = vector.shape_cast %141 : vector<8x32xf32> to vector<1x8x32xf32>
    tpu.vector_store %arg11[%c0_60, %c0_61, %c0_62], %144 {strides = array<i32>} : memref<1x8x32xf32, #tpu.memory_space<vmem>>, vector<1x8x32xf32>,
    return
  }
  func.func @transform_0(%arg0: i32) -> (i32, i32, i32) {
    %c0_i32 = arith.constant 0 : i32
    %c0_i32_0 = arith.constant 0 : i32
    %c0_i32_1 = arith.constant 0 : i32
    return %arg0, %c0_i32, %c0_i32_0 : i32, i32, i32
  }
  func.func @transform_1(%arg0: i32) -> (i32, i32) {
    %c0_i32 = arith.constant 0 : i32
    %c0_i32_0 = arith.constant 0 : i32
    %c0_i32_1 = arith.constant 0 : i32
    return %c0_i32, %c0_i32_0 : i32, i32
  }
  func.func @transform_2(%arg0: i32) -> (i32, i32, i32) {
    %c0_i32 = arith.constant 0 : i32
    %c0_i32_0 = arith.constant 0 : i32
    %c0_i32_1 = arith.constant 0 : i32
    %c0_i32_2 = arith.constant 0 : i32
    return %c0_i32, %c0_i32_0, %c0_i32_1 : i32, i32, i32
  }
  func.func @transform_3(%arg0: i32) -> (i32, i32) {
    %c0_i32 = arith.constant 0 : i32
    %c0_i32_0 = arith.constant 0 : i32
    %c0_i32_1 = arith.constant 0 : i32
    return %c0_i32, %c0_i32_0 : i32, i32
  }
  func.func @transform_4(%arg0: i32) -> (i32, i32) {
    %c0_i32 = arith.constant 0 : i32
    %c0_i32_0 = arith.constant 0 : i32
    %c0_i32_1 = arith.constant 0 : i32
    return %c0_i32, %c0_i32_0 : i32, i32
  }
  func.func @transform_5(%arg0: i32) -> (i32, i32) {
    %c0_i32 = arith.constant 0 : i32
    %c0_i32_0 = arith.constant 0 : i32
    %c0_i32_1 = arith.constant 0 : i32
    return %c0_i32, %c0_i32_0 : i32, i32
  }
  func.func @transform_6(%arg0: i32) -> (i32, i32) {
    %c0_i32 = arith.constant 0 : i32
    %c0_i32_0 = arith.constant 0 : i32
    %c0_i32_1 = arith.constant 0 : i32
    return %c0_i32, %c0_i32_0 : i32, i32
  }
  func.func @transform_7(%arg0: i32) -> (i32, i32) {
    %c0_i32 = arith.constant 0 : i32
    %c0_i32_0 = arith.constant 0 : i32
    %c0_i32_1 = arith.constant 0 : i32
    return %c0_i32, %c0_i32_0 : i32, i32
  }
  func.func @transform_8(%arg0: i32) -> (i32, i32) {
    %c0_i32 = arith.constant 0 : i32
    %c0_i32_0 = arith.constant 0 : i32
    %c0_i32_1 = arith.constant 0 : i32
    return %c0_i32, %c0_i32_0 : i32, i32
  }
  func.func @transform_9(%arg0: i32) -> (i32, i32) {
    %c0_i32 = arith.constant 0 : i32
    %c0_i32_0 = arith.constant 0 : i32
    %c0_i32_1 = arith.constant 0 : i32
    return %c0_i32, %c0_i32_0 : i32, i32
  }
  func.func @transform_10(%arg0: i32) -> (i32, i32, i32) {
    %c0_i32 = arith.constant 0 : i32
    %c0_i32_0 = arith.constant 0 : i32
    %c0_i32_1 = arith.constant 0 : i32
    return %arg0, %c0_i32, %c0_i32_0 : i32, i32, i32
  }
}

</mosaic_0001>

<llo_original>
// kernel: tpu_custom_call.1
$region0: #{tpu_custom_call.1}
  #allocation0 [shape = 'u32[]', space=smem, size = 0x4, offset = 0x4, fixed_abs, tag = 'smem constant byte address 0x4 - core index']
  #allocation1 [shape = 'u32[144,128]{1,0:T(1,128)}', space=vmem, size = 0x12000, scoped, tag = 'internal scratch']
  %s0 = inlined_call_operand.hbm [shape: f32[2,8,32], index: 0, kind: input, shape index: {}]
  %s1 = inlined_call_operand.vmem [shape: f32[32,192], index: 1, kind: input, shape index: {}]
  %s2 = inlined_call_operand.hbm [shape: f32[2,32,32], index: 2, kind: input, shape index: {}]
  %s3 = inlined_call_operand.vmem [shape: f32[1,32], index: 3, kind: input, shape index: {}]
  %s4 = inlined_call_operand.vmem [shape: f32[1,32], index: 4, kind: input, shape index: {}]
  %s5 = inlined_call_operand.vmem [shape: f32[1,32], index: 5, kind: input, shape index: {}]
  %s6 = inlined_call_operand.vmem [shape: f32[32,64], index: 6, kind: input, shape index: {}]
  %s7 = inlined_call_operand.vmem [shape: f32[1,64], index: 7, kind: input, shape index: {}]
  %s8 = inlined_call_operand.vmem [shape: f32[64,32], index: 8, kind: input, shape index: {}]
  %s9 = inlined_call_operand.vmem [shape: f32[1,32], index: 9, kind: input, shape index: {}]
  %s10 = inlined_call_operand.hbm [shape: f32[2,8,32], index: 10, kind: output, shape index: {}]
  %s11 = sld [smem:[#allocation0]]
  $region81: #{tpu_custom_call.1} parent=0
    _
  %s13 = ssub.s32 1, %s11
  %s14 = scalar_select 0, %s13, %s11
  $region1: #{tpu_custom_call.1} parent=0
    #allocation2 [shape = 'u8[8192]{0}', space=vmem, size = 0x2000, scoped, tag = 'input window, operand 0']
    #allocation3 [shape = 's32[2]{0}', space=sflag, size = 0x8, scoped, tag = 'scoped memory for tpu_custom_call.1']
    #allocation4 [shape = 's32[2]{0}', space=sflag, size = 0x8, scoped, tag = 'scoped memory for tpu_custom_call.1']
    #allocation5 [shape = 'u8[32768]{0}', space=vmem, size = 0x8000, scoped, tag = 'input window, operand 2, single buffered']
    #allocation6 [shape = 's32[1]{0}', space=sflag, size = 0x4, scoped, tag = 'scoped memory for tpu_custom_call.1']
    #allocation7 [shape = 'u8[8192]{0}', space=vmem, size = 0x2000, scoped, tag = 'output window, operand 0']
    %15 = vsyncpa [#allocation3], 0
    %s16 = scalar_lea.sflag [#allocation3], 1
    %17 = vsyncpa %s16, 0
    %18 = vsyncpa [#allocation6], 0
    %19 = vsyncpa [#allocation4], 0
    %s20 = scalar_lea.sflag [#allocation4], 1
    %21 = vsyncpa %s20, 0
    loop: start=0, step=1, limit=4
    $region2: #{tpu_custom_call.1} parent=1 // loop_pre_header
      _
    $region3: #{tpu_custom_call.1} parent=1 // loop_header
      %s23 = sphi 0, %s27
      %p24 = scmp.ge.s32.totalorder %s23, 4
      %s33 = sphi 0, %s35
      %s36 = sphi 0, %s33
      %s37 = sphi 0, %s36
      %s53 = sphi 0, %s37
      %s57 = sphi 0, %s57
      %s59 = sphi 0, %s57
      %s60 = sphi 0, %s59
      %s74 = sphi 0, %s60
      %s78 = sphi 0, %s78
      %s80 = sphi 0, %s78
      %s81 = sphi 0, %s80
      %s95 = sphi 0, %s81
      %s99 = sphi 0, %s99
      %s101 = sphi 0, %s99
      %s102 = sphi 0, %s101
      %s116 = sphi 0, %s102
      %s120 = sphi 0, %s120
      %s122 = sphi 0, %s120
      %s123 = sphi 0, %s122
      %s137 = sphi 0, %s123
      %s141 = sphi 0, %s141
      %s143 = sphi 0, %s141
      %s144 = sphi 0, %s143
      %s158 = sphi 0, %s144
      %s162 = sphi 0, %s162
      %s164 = sphi 0, %s162
      %s165 = sphi 0, %s164
      %s179 = sphi 0, %s165
      %s183 = sphi 0, %s183
      %s185 = sphi 0, %s183
      %s186 = sphi 0, %s185
      %s200 = sphi 0, %s186
      %s204 = sphi 0, %s204
      %s206 = sphi 0, %s204
      %s207 = sphi 0, %s206
      %s221 = sphi 0, %s207
      %s225 = sphi 0, %s225
      %s227 = sphi 0, %s225
      %s228 = sphi 0, %s227
      %s242 = sphi 0, %s228
      %s248 = sphi 0, %s250
      %s251 = sphi 0, %s248
      %s252 = sphi 0, %s251
      %s268 = sphi 0, %s252
    $region4: #{tpu_custom_call.1} parent=1 // loop_header_branch
      %26 = sbr.rel (%p24) target = $region8
    $region5: #{tpu_custom_call.1} parent=1 // loop_body
      %s28 = ssub.s32 %s23, 1
      %s29 = ssub.s32 %s23, 2
      %s30 = sadd.s32 %s23, 1
      %s31 = ssub.s32 %s23, %s30
      %p32 = scmp.eq.s32.totalorder %s31, 0
      %s34 = sadd.s32 %s33, 1
      %s35 = scalar_select %p32, %s33, %s34
      %p38 = pneg %p32
      %p39 = scmp.eq.s32.totalorder %s23, 1
      %p40 = por %p38, %p39
      %p41 = scmp.ne.s32.totalorder %s33, %s36
      %p42 = scmp.eq.s32.totalorder %s23, 0
      %p43 = por %p41, %p42
      %p44 = scmp.ne.s32.totalorder %s33, %s36
      %p45 = scmp.eq.s32.totalorder %s28, 1
      %p46 = por %p44, %p45
      %p47 = scmp.ne.s32.totalorder %s36, %s37
      %p48 = scmp.eq.s32.totalorder %s28, 0
      %p49 = por %p47, %p48
      %p50 = scmp.ne.s32.totalorder %s36, %s37
      %p51 = scmp.eq.s32.totalorder %s29, 1
      %p52 = por %p50, %p51
      %p54 = scmp.ne.s32.totalorder %s37, %s53
      %p55 = scmp.eq.s32.totalorder %s29, 0
      %p56 = por %p54, %p55
      %s58 = sadd.s32 %s57, 1
      %p61 = scmp.eq.s32.totalorder %s23, 1
      %p62 = scmp.ne.s32.totalorder %s57, %s59
      %p63 = scmp.eq.s32.totalorder %s23, 0
      %p64 = por %p62, %p63
      %p65 = scmp.ne.s32.totalorder %s57, %s59
      %p66 = scmp.eq.s32.totalorder %s28, 1
      %p67 = por %p65, %p66
      %p68 = scmp.ne.s32.totalorder %s59, %s60
      %p69 = scmp.eq.s32.totalorder %s28, 0
      %p70 = por %p68, %p69
      %p71 = scmp.ne.s32.totalorder %s59, %s60
      %p72 = scmp.eq.s32.totalorder %s29, 1
      %p73 = por %p71, %p72
      %p75 = scmp.ne.s32.totalorder %s60, %s74
      %p76 = scmp.eq.s32.totalorder %s29, 0
      %p77 = por %p75, %p76
      %s79 = sadd.s32 %s78, 1
      %p82 = scmp.eq.s32.totalorder %s23, 1
      %p83 = scmp.ne.s32.totalorder %s78, %s80
      %p84 = scmp.eq.s32.totalorder %s23, 0
      %p85 = por %p83, %p84
      %p86 = scmp.ne.s32.totalorder %s78, %s80
      %p87 = scmp.eq.s32.totalorder %s28, 1
      %p88 = por %p86, %p87
      %p89 = scmp.ne.s32.totalorder %s80, %s81
      %p90 = scmp.eq.s32.totalorder %s28, 0
      %p91 = por %p89, %p90
      %p92 = scmp.ne.s32.totalorder %s80, %s81
      %p93 = scmp.eq.s32.totalorder %s29, 1
      %p94 = por %p92, %p93
      %p96 = scmp.ne.s32.totalorder %s81, %s95
      %p97 = scmp.eq.s32.totalorder %s29, 0
      %p98 = por %p96, %p97
      %s100 = sadd.s32 %s99, 1
      %p103 = scmp.eq.s32.totalorder %s23, 1
      %p104 = scmp.ne.s32.totalorder %s99, %s101
      %p105 = scmp.eq.s32.totalorder %s23, 0
      %p106 = por %p104, %p105
      %p107 = scmp.ne.s32.totalorder %s99, %s101
      %p108 = scmp.eq.s32.totalorder %s28, 1
      %p109 = por %p107, %p108
      %p110 = scmp.ne.s32.totalorder %s101, %s102
      %p111 = scmp.eq.s32.totalorder %s28, 0
      %p112 = por %p110, %p111
      %p113 = scmp.ne.s32.totalorder %s101, %s102
      %p114 = scmp.eq.s32.totalorder %s29, 1
      %p115 = por %p113, %p114
      %p117 = scmp.ne.s32.totalorder %s102, %s116
      %p118 = scmp.eq.s32.totalorder %s29, 0
      %p119 = por %p117, %p118
      %s121 = sadd.s32 %s120, 1
      %p124 = scmp.eq.s32.totalorder %s23, 1
      %p125 = scmp.ne.s32.totalorder %s120, %s122
      %p126 = scmp.eq.s32.totalorder %s23, 0
      %p127 = por %p125, %p126
      %p128 = scmp.ne.s32.totalorder %s120, %s122
      %p129 = scmp.eq.s32.totalorder %s28, 1
      %p130 = por %p128, %p129
      %p131 = scmp.ne.s32.totalorder %s122, %s123
      %p132 = scmp.eq.s32.totalorder %s28, 0
      %p133 = por %p131, %p132
      %p134 = scmp.ne.s32.totalorder %s122, %s123
      %p135 = scmp.eq.s32.totalorder %s29, 1
      %p136 = por %p134, %p135
      %p138 = scmp.ne.s32.totalorder %s123, %s137
      %p139 = scmp.eq.s32.totalorder %s29, 0
      %p140 = por %p138, %p139
      %s142 = sadd.s32 %s141, 1
      %p145 = scmp.eq.s32.totalorder %s23, 1
      %p146 = scmp.ne.s32.totalorder %s141, %s143
      %p147 = scmp.eq.s32.totalorder %s23, 0
      %p148 = por %p146, %p147
      %p149 = scmp.ne.s32.totalorder %s141, %s143
      %p150 = scmp.eq.s32.totalorder %s28, 1
      %p151 = por %p149, %p150
      %p152 = scmp.ne.s32.totalorder %s143, %s144
      %p153 = scmp.eq.s32.totalorder %s28, 0
      %p154 = por %p152, %p153
      %p155 = scmp.ne.s32.totalorder %s143, %s144
      %p156 = scmp.eq.s32.totalorder %s29, 1
      %p157 = por %p155, %p156
      %p159 = scmp.ne.s32.totalorder %s144, %s158
      %p160 = scmp.eq.s32.totalorder %s29, 0
      %p161 = por %p159, %p160
      %s163 = sadd.s32 %s162, 1
      %p166 = scmp.eq.s32.totalorder %s23, 1
      %p167 = scmp.ne.s32.totalorder %s162, %s164
      %p168 = scmp.eq.s32.totalorder %s23, 0
      %p169 = por %p167, %p168
      %p170 = scmp.ne.s32.totalorder %s162, %s164
      %p171 = scmp.eq.s32.totalorder %s28, 1
      %p172 = por %p170, %p171
      %p173 = scmp.ne.s32.totalorder %s164, %s165
      %p174 = scmp.eq.s32.totalorder %s28, 0
      %p175 = por %p173, %p174
      %p176 = scmp.ne.s32.totalorder %s164, %s165
      %p177 = scmp.eq.s32.totalorder %s29, 1
      %p178 = por %p176, %p177
      %p180 = scmp.ne.s32.totalorder %s165, %s179
      %p181 = scmp.eq.s32.totalorder %s29, 0
      %p182 = por %p180, %p181
      %s184 = sadd.s32 %s183, 1
      %p187 = scmp.eq.s32.totalorder %s23, 1
      %p188 = scmp.ne.s32.totalorder %s183, %s185
      %p189 = scmp.eq.s32.totalorder %s23, 0
      %p190 = por %p188, %p189
      %p191 = scmp.ne.s32.totalorder %s183, %s185
      %p192 = scmp.eq.s32.totalorder %s28, 1
      %p193 = por %p191, %p192
      %p194 = scmp.ne.s32.totalorder %s185, %s186
      %p195 = scmp.eq.s32.totalorder %s28, 0
      %p196 = por %p194, %p195
      %p197 = scmp.ne.s32.totalorder %s185, %s186
      %p198 = scmp.eq.s32.totalorder %s29, 1
      %p199 = por %p197, %p198
      %p201 = scmp.ne.s32.totalorder %s186, %s200
      %p202 = scmp.eq.s32.totalorder %s29, 0
      %p203 = por %p201, %p202
      %s205 = sadd.s32 %s204, 1
      %p208 = scmp.eq.s32.totalorder %s23, 1
      %p209 = scmp.ne.s32.totalorder %s204, %s206
      %p210 = scmp.eq.s32.totalorder %s23, 0
      %p211 = por %p209, %p210
      %p212 = scmp.ne.s32.totalorder %s204, %s206
      %p213 = scmp.eq.s32.totalorder %s28, 1
      %p214 = por %p212, %p213
      %p215 = scmp.ne.s32.totalorder %s206, %s207
      %p216 = scmp.eq.s32.totalorder %s28, 0
      %p217 = por %p215, %p216
      %p218 = scmp.ne.s32.totalorder %s206, %s207
      %p219 = scmp.eq.s32.totalorder %s29, 1
      %p220 = por %p218, %p219
      %p222 = scmp.ne.s32.totalorder %s207, %s221
      %p223 = scmp.eq.s32.totalorder %s29, 0
      %p224 = por %p222, %p223
      %s226 = sadd.s32 %s225, 1
      %p229 = scmp.eq.s32.totalorder %s23, 1
      %p230 = scmp.ne.s32.totalorder %s225, %s227
      %p231 = scmp.eq.s32.totalorder %s23, 0
      %p232 = por %p230, %p231
      %p233 = scmp.ne.s32.totalorder %s225, %s227
      %p234 = scmp.eq.s32.totalorder %s28, 1
      %p235 = por %p233, %p234
      %p236 = scmp.ne.s32.totalorder %s227, %s228
      %p237 = scmp.eq.s32.totalorder %s28, 0
      %p238 = por %p236, %p237
      %p239 = scmp.ne.s32.totalorder %s227, %s228
      %p240 = scmp.eq.s32.totalorder %s29, 1
      %p241 = por %p239, %p240
      %p243 = scmp.ne.s32.totalorder %s228, %s242
      %p244 = scmp.eq.s32.totalorder %s29, 0
      %p245 = por %p243, %p244
      %s246 = ssub.s32 %s23, %s30
      %p247 = scmp.eq.s32.totalorder %s246, 0
      %s249 = sadd.s32 %s248, 1
      %s250 = scalar_select %p247, %s248, %s249
      %p253 = pneg %p247
      %p254 = scmp.eq.s32.totalorder %s23, 1
      %p255 = por %p253, %p254
      %p256 = scmp.ne.s32.totalorder %s248, %s251
      %p257 = scmp.eq.s32.totalorder %s23, 0
      %p258 = por %p256, %p257
      %p259 = scmp.ne.s32.totalorder %s248, %s251
      %p260 = scmp.eq.s32.totalorder %s28, 1
      %p261 = por %p259, %p260
      %p262 = scmp.ne.s32.totalorder %s251, %s252
      %p263 = scmp.eq.s32.totalorder %s28, 0
      %p264 = por %p262, %p263
      %p265 = scmp.ne.s32.totalorder %s251, %s252
      %p266 = scmp.eq.s32.totalorder %s29, 1
      %p267 = por %p265, %p266
      %p269 = scmp.ne.s32.totalorder %s252, %s268
      %p270 = scmp.eq.s32.totalorder %s29, 0
      %p271 = por %p269, %p270
      %p272 = scmp.le.s32.totalorder 1, %s23
      %p273 = scmp.lt.s32.totalorder %s23, 3
      %p274 = pnand %p272, %p273
      %p275 = pneg %p274
      // Predicated region
      $region9: #{tpu_custom_call.1} parent=5 // pred_check
        _
      $region10: #{tpu_custom_call.1} parent=5 // pred_check_branch
        %277 = sbr.rel (%p274) target = $region12
      $region11: #{tpu_custom_call.1} parent=5 // pred_region
        %s278 = ssub.s32 %s23, 1
        // Predicated region
        $region13: #{tpu_custom_call.1} parent=11 // pred_check
          %p279 = pneg %p70
        $region14: #{tpu_custom_call.1} parent=11 // pred_check_branch
          %281 = sbr.rel (%p279) target = $region16
        $region15: #{tpu_custom_call.1} parent=11 // pred_region
          _
        $region16: #{tpu_custom_call.1} parent=11 // pred_fallthru
          _
        // Predicated region
        $region17: #{tpu_custom_call.1} parent=11 // pred_check
          %p282 = pneg %p91
        $region18: #{tpu_custom_call.1} parent=11 // pred_check_branch
          %284 = sbr.rel (%p282) target = $region20
        $region19: #{tpu_custom_call.1} parent=11 // pred_region
          %s286 = ssub.s32 1024, 1024
          %287 = vsyncadd [#allocation6], %s286
          %s288 = sshll.u32 [#allocation5], 4
          %s289 = int_to_ptr.vmem [resolvable:$true] %s288
          %294 = dma.hbm_to_vmem [thread:$0]  %s2, 1024, %s289, [#allocation6], 128, 128, 8
        $region20: #{tpu_custom_call.1} parent=11 // pred_fallthru
          _
        // Predicated region
        $region21: #{tpu_custom_call.1} parent=11 // pred_check
          %p295 = pneg %p112
        $region22: #{tpu_custom_call.1} parent=11 // pred_check_branch
          %297 = sbr.rel (%p295) target = $region24
        $region23: #{tpu_custom_call.1} parent=11 // pred_region
          _
        $region24: #{tpu_custom_call.1} parent=11 // pred_fallthru
          _
        // Predicated region
        $region25: #{tpu_custom_call.1} parent=11 // pred_check
          %p298 = pneg %p133
        $region26: #{tpu_custom_call.1} parent=11 // pred_check_branch
          %300 = sbr.rel (%p298) target = $region28
        $region27: #{tpu_custom_call.1} parent=11 // pred_region
          _
        $region28: #{tpu_custom_call.1} parent=11 // pred_fallthru
          _
        // Predicated region
        $region29: #{tpu_custom_call.1} parent=11 // pred_check
          %p301 = pneg %p154
        $region30: #{tpu_custom_call.1} parent=11 // pred_check_branch
          %303 = sbr.rel (%p301) target = $region32
        $region31: #{tpu_custom_call.1} parent=11 // pred_region
          _
        $region32: #{tpu_custom_call.1} parent=11 // pred_fallthru
          _
        // Predicated region
        $region33: #{tpu_custom_call.1} parent=11 // pred_check
          %p304 = pneg %p175
        $region34: #{tpu_custom_call.1} parent=11 // pred_check_branch
          %306 = sbr.rel (%p304) target = $region36
        $region35: #{tpu_custom_call.1} parent=11 // pred_region
          _
        $region36: #{tpu_custom_call.1} parent=11 // pred_fallthru
          _
        // Predicated region
        $region37: #{tpu_custom_call.1} parent=11 // pred_check
          %p307 = pneg %p196
        $region38: #{tpu_custom_call.1} parent=11 // pred_check_branch
          %309 = sbr.rel (%p307) target = $region40
        $region39: #{tpu_custom_call.1} parent=11 // pred_region
          _
        $region40: #{tpu_custom_call.1} parent=11 // pred_fallthru
          _
        // Predicated region
        $region41: #{tpu_custom_call.1} parent=11 // pred_check
          %p310 = pneg %p217
        $region42: #{tpu_custom_call.1} parent=11 // pred_check_branch
          %312 = sbr.rel (%p310) target = $region44
        $region43: #{tpu_custom_call.1} parent=11 // pred_region
          _
        $region44: #{tpu_custom_call.1} parent=11 // pred_fallthru
          _
        // Predicated region
        $region45: #{tpu_custom_call.1} parent=11 // pred_check
          %p313 = pneg %p238
        $region46: #{tpu_custom_call.1} parent=11 // pred_check_branch
          %315 = sbr.rel (%p313) target = $region48
        $region47: #{tpu_custom_call.1} parent=11 // pred_region
          _
        $region48: #{tpu_custom_call.1} parent=11 // pred_fallthru
          _
      $region12: #{tpu_custom_call.1} parent=5 // pred_fallthru
        _
      %p316 = scmp.lt.s32.totalorder %s23, 2
      // Predicated region
      $region49: #{tpu_custom_call.1} parent=5 // pred_check
        %p317 = pneg %p316
      $region50: #{tpu_custom_call.1} parent=5 // pred_check_branch
        %319 = sbr.rel (%p317) target = $region52
      $region51: #{tpu_custom_call.1} parent=5 // pred_region
        // Predicated region
        $region53: #{tpu_custom_call.1} parent=51 // pred_check
          %p320 = pneg %p43
        $region54: #{tpu_custom_call.1} parent=51 // pred_check_branch
          %322 = sbr.rel (%p320) target = $region56
        $region55: #{tpu_custom_call.1} parent=51 // pred_region
          %s323 = sand.u32 %s33, 1
          %s324 = scalar_lea.sflag [#allocation3], %s323
          %s325 = sand.u32 %s33, 1
          %s326 = smul.addr %s325, 8
          %s327 = scalar_lea.vmem [#allocation2], %s326
          %s329 = ssub.s32 128, 128
          %330 = vsyncadd %s324, %s329
          %s331 = smul.addr %s23, 128
          %s332 = scalar_lea.hbm %s0, %s331
          %s334 = sshll.u32 %s327, 4
          %s335 = int_to_ptr.vmem [resolvable:$true] %s334
          %337 = dma.hbm_to_vmem [thread:$0]  %s332, 128, %s335, %s324
        $region56: #{tpu_custom_call.1} parent=51 // pred_fallthru
          _
      $region52: #{tpu_custom_call.1} parent=5 // pred_fallthru
        _
      %p338 = scmp.le.s32.totalorder 1, %s23
      %p339 = scmp.lt.s32.totalorder %s23, 3
      %p340 = pnand %p338, %p339
      %p341 = pneg %p340
      // Predicated region
      $region57: #{tpu_custom_call.1} parent=5 // pred_check
        _
      $region58: #{tpu_custom_call.1} parent=5 // pred_check_branch
        %343 = sbr.rel (%p340) target = $region60
      $region59: #{tpu_custom_call.1} parent=5 // pred_region
        %s344 = ssub.s32 %s23, 1
        %s345 = sand.u32 %s36, 1
        %s346 = scalar_lea.sflag [#allocation3], %s345
        %s347 = sand.u32 %s36, 1
        %s348 = smul.addr %s347, 8
        %s349 = scalar_lea.vmem [#allocation2], %s348
        // Predicated region
        $region61: #{tpu_custom_call.1} parent=59 // pred_check
          %p350 = pneg %p49
        $region62: #{tpu_custom_call.1} parent=59 // pred_check_branch
          %352 = sbr.rel (%p350) target = $region64
        $region63: #{tpu_custom_call.1} parent=59 // pred_region
          %353 = dma.done %s346, 128
        $region64: #{tpu_custom_call.1} parent=59 // pred_fallthru
          _
        // Predicated region
        $region65: #{tpu_custom_call.1} parent=59 // pred_check
          %p354 = pneg %p91
        $region66: #{tpu_custom_call.1} parent=59 // pred_check_branch
          %356 = sbr.rel (%p354) target = $region68
        $region67: #{tpu_custom_call.1} parent=59 // pred_region
          %357 = dma.done [#allocation6], 1024
        $region68: #{tpu_custom_call.1} parent=59 // pred_fallthru
          _
        %s358 = sand.u32 %s36, 1
        %s359 = scalar_lea.sflag [#allocation3], %s358
        %s360 = sand.u32 %s36, 1
        %s361 = smul.addr %s360, 8
        %s362 = scalar_lea.vmem [#allocation2], %s361
        %p363 = pneg %p49
        %p364 = pneg %p46
        %p365 = pneg %p70
        %p366 = pneg %p67
        %p367 = pneg %p91
        %p368 = pneg %p88
        %p369 = pneg %p112
        %p370 = pneg %p109
        %p371 = pneg %p133
        %p372 = pneg %p130
        %p373 = pneg %p154
        %p374 = pneg %p151
        %p375 = pneg %p175
        %p376 = pneg %p172
        %p377 = pneg %p196
        %p378 = pneg %p193
        %p379 = pneg %p217
        %p380 = pneg %p214
        %p381 = pneg %p238
        %p382 = pneg %p235
        %p383 = pneg %p264
        %p384 = pneg %p261
        %s385 = sand.u32 %s251, 1
        %s386 = scalar_lea.sflag [#allocation4], %s385
        %s387 = sand.u32 %s251, 1
        %s388 = smul.addr %s387, 8
        %s389 = scalar_lea.vmem [#allocation7], %s388
        %v390 = vld [vmem:[%s349] sm:$0xff]
        %v391 = vld [vmem:[%s4] sm:$0x1]
        %v392 = vld [vmem:[%s5] sm:$0x1]
        %v393 = vld [vmem:[%s1] sm:$0xff]
        %v394 = vld [vmem:[%s1 + $0x8] sm:$0xff]
        %v395 = vld [vmem:[%s1 + $0x10] sm:$0xff]
        %v396 = vld [vmem:[%s1 + $0x18] sm:$0xff]
        %v397 = vld [vmem:[%s1 + $0x20] sm:$0xff]
        %v398 = vld [vmem:[%s1 + $0x28] sm:$0xff]
        %v399 = vld [vmem:[%s1 + $0x30] sm:$0xff]
        %v400 = vld [vmem:[%s1 + $0x38] sm:$0xff]
        %vm401 = vcmask 261120
        %v403 = vsel %vm401, %v390, 0
        %405 = vmatprep.subr.mxu0 %v394
        %406 = vmatpush1.msra.mxu0 %v393
        %407 = vmatprep.subr.mxu0 %v396
        %408 = vmatpush1.msra.mxu0 %v395
        %409 = vmatprep.subr.mxu0 %v398
        %410 = vmatpush1.msra.mxu0 %v397
        %411 = vmatprep.subr.mxu0 %v400
        %412 = vmatpush1.msra.mxu0 %v399
        %413 = vmatprep.subr.mxu0 0.0
        %414 = vmatpush1.msra.mxu0 0.0
        %415 = vmatprep.subr.mxu0 0.0
        %416 = vmatpush1.msra.mxu0 0.0
        %417 = vmatprep.subr.mxu0 0.0
        %418 = vmatpush1.msra.mxu0 0.0
        %419 = vmatprep.subr.mxu0 0.0
        %420 = vmatpush1.msra.mxu0 0.0
        %421 = vmatprep.subr.mxu0 0.0
        %422 = vmatpush1.msra.mxu0 0.0
        %423 = vmatprep.subr.mxu0 0.0
        %424 = vmatpush1.msra.mxu0 0.0
        %425 = vmatprep.subr.mxu0 0.0
        %426 = vmatpush1.msra.mxu0 0.0
        %427 = vmatprep.subr.mxu0 0.0
        %428 = vmatpush1.msra.mxu0 0.0
        %429 = vmatprep.subr.mxu0 0.0
        %430 = vmatpush1.msra.mxu0 0.0
        %431 = vmatprep.subr.mxu0 0.0
        %432 = vmatpush1.msra.mxu0 0.0
        %433 = vmatprep.subr.mxu0 0.0
        %434 = vmatpush1.msra.mxu0 0.0
        %435 = vmatprep.subr.mxu0 0.0
        %436 = vmatpush1.msra.mxu0 0.0
        %437 = vmatprep.subr.mxu0 0.0
        %438 = vmatpush1.msra.mxu0 0.0
        %439 = vmatprep.subr.mxu0 0.0
        %440 = vmatpush1.msra.mxu0 0.0
        %441 = vmatprep.subr.mxu0 0.0
        %442 = vmatpush1.msra.mxu0 0.0
        %443 = vmatprep.subr.mxu0 0.0
        %444 = vmatpush1.msra.mxu0 0.0
        %445 = vmatprep.subr.mxu0 0.0
        %446 = vmatpush1.msra.mxu0 0.0
        %447 = vmatprep.subr.mxu0 0.0
        %448 = vmatpush1.msra.mxu0 0.0
        %449 = vmatprep.subr.mxu0 0.0
        %450 = vmatpush1.msra.mxu0 0.0
        %451 = vmatprep.subr.mxu0 0.0
        %452 = vmatpush1.msra.mxu0 0.0
        %453 = vmatprep.subr.mxu0 0.0
        %454 = vmatpush1.msra.mxu0 0.0
        %455 = vmatprep.subr.mxu0 0.0
        %456 = vmatpush1.msra.mxu0 0.0
        %457 = vmatprep.subr.mxu0 0.0
        %458 = vmatpush1.msra.mxu0 0.0
        %459 = vmatprep.subr.mxu0 0.0
        %460 = vmatpush1.msra.mxu0 0.0
        %461 = vmatprep.subr.mxu0 0.0
        %462 = vmatpush1.msra.mxu0 0.0
        %463 = vmatprep.subr.mxu0 0.0
        %464 = vmatpush1.msra.mxu0 0.0
        %465 = vmatprep.subr.mxu0 0.0
        %466 = vmatpush1.msra.mxu0 0.0
        %467 = vmatprep.subr.mxu0 0.0
        %468 = vmatpush1.msra.mxu0 0.0
        %469 = vmatprep.mubr.f32.mxu0 0.0
        %470 = vmatmul.mubr.f32.gmra.mrb[0].mxu0 %v403
        %v471 = vpop.f32.mrb[0].mxu0
        %v472 = vadd.f32 0.0, %v471
        %v473 = vpop.f32.mrb[0].mxu0
        %v474 = vadd.f32 0.0, %v473
        %475 = vdwg.mxu0
        %477 = vrot.lane.b32.xlu0 %v472, 96
        %v478 = vpop.permute.xlu0 %477
        %v479 = vsel %vm401, %v472, 0
        %v481 = vsel %vm401, %v478, 0
        %483 = vmatprep.subr.mxu0 0.0
        %484 = vmatpush1.xpose.msra.mxu0 %v481
        %485 = vmatprep.subr.mxu0 0.0
        %486 = vmatpush1.xpose.msra.mxu0 0.0
        %487 = vmatprep.subr.mxu0 0.0
        %488 = vmatpush1.xpose.msra.mxu0 0.0
        %489 = vmatprep.subr.mxu0 0.0
        %490 = vmatpush1.xpose.msra.mxu0 0.0
        %491 = vmatprep.subr.mxu0 0.0
        %492 = vmatpush1.xpose.msra.mxu0 0.0
        %493 = vmatprep.subr.mxu0 0.0
        %494 = vmatpush1.xpose.msra.mxu0 0.0
        %495 = vmatprep.subr.mxu0 0.0
        %496 = vmatpush1.xpose.msra.mxu0 0.0
        %497 = vmatprep.subr.mxu0 0.0
        %498 = vmatpush1.xpose.msra.mxu0 0.0
        %499 = vmatprep.subr.mxu0 0.0
        %500 = vmatpush1.xpose.msra.mxu0 0.0
        %501 = vmatprep.subr.mxu0 0.0
        %502 = vmatpush1.xpose.msra.mxu0 0.0
        %503 = vmatprep.subr.mxu0 0.0
        %504 = vmatpush1.xpose.msra.mxu0 0.0
        %505 = vmatprep.subr.mxu0 0.0
        %506 = vmatpush1.xpose.msra.mxu0 0.0
        %507 = vmatprep.subr.mxu0 0.0
        %508 = vmatpush1.xpose.msra.mxu0 0.0
        %509 = vmatprep.subr.mxu0 0.0
        %510 = vmatpush1.xpose.msra.mxu0 0.0
        %511 = vmatprep.subr.mxu0 0.0
        %512 = vmatpush1.xpose.msra.mxu0 0.0
        %513 = vmatprep.subr.mxu0 0.0
        %514 = vmatpush1.xpose.msra.mxu0 0.0
        %515 = vmatprep.subr.mxu0 0.0
        %516 = vmatpush1.xpose.msra.mxu0 0.0
        %517 = vmatprep.subr.mxu0 0.0
        %518 = vmatpush1.xpose.msra.mxu0 0.0
        %519 = vmatprep.subr.mxu0 0.0
        %520 = vmatpush1.xpose.msra.mxu0 0.0
        %521 = vmatprep.subr.mxu0 0.0
        %522 = vmatpush1.xpose.msra.mxu0 0.0
        %523 = vmatprep.subr.mxu0 0.0
        %524 = vmatpush1.xpose.msra.mxu0 0.0
        %525 = vmatprep.subr.mxu0 0.0
        %526 = vmatpush1.xpose.msra.mxu0 0.0
        %527 = vmatprep.subr.mxu0 0.0
        %528 = vmatpush1.xpose.msra.mxu0 0.0
        %529 = vmatprep.subr.mxu0 0.0
        %530 = vmatpush1.xpose.msra.mxu0 0.0
        %531 = vmatprep.subr.mxu0 0.0
        %532 = vmatpush1.xpose.msra.mxu0 0.0
        %533 = vmatprep.subr.mxu0 0.0
        %534 = vmatpush1.xpose.msra.mxu0 0.0
        %535 = vmatprep.subr.mxu0 0.0
        %536 = vmatpush1.xpose.msra.mxu0 0.0
        %537 = vmatprep.subr.mxu0 0.0
        %538 = vmatpush1.xpose.msra.mxu0 0.0
        %539 = vmatprep.subr.mxu0 0.0
        %540 = vmatpush1.xpose.msra.mxu0 0.0
        %541 = vmatprep.subr.mxu0 0.0
        %542 = vmatpush1.xpose.msra.mxu0 0.0
        %543 = vmatprep.subr.mxu0 0.0
        %544 = vmatpush1.xpose.msra.mxu0 0.0
        %545 = vmatprep.subr.mxu0 0.0
        %546 = vmatpush1.xpose.msra.mxu0 0.0
        %547 = vmatprep.mubr.f32.mxu0 0.0
        %548 = vmatmul.mubr.f32.gmra.mrb[0].mxu0 %v479
        %v549 = vpop.f32.mrb[0].mxu0
        %v550 = vadd.f32 0.0, %v549
        %v551 = vpop.f32.mrb[0].mxu0
        %552 = vdwg.mxu0
        %vm553 = vcmask 64512
        %v554 = vsel %vm553, %v550, -inf
        %555 = vmax.xlane.f32.xlu0 %v554
        %v556 = vpop.xlane.xlu0 %555
        %v557 = vsub.f32 %v550, %v556
        %v558 = vmul.f32 %v557, 1.442695
        %v559 = vpow.pop %v558
        %v560 = vsel %vm553, %v559, 0.0
        %561 = vadd.xlane.f32.xlu0 %v560
        %v562 = vpop.xlane.xlu0 %561
        %563 = vrot.lane.b32.xlu0 %v472, 64
        %v564 = vpop.permute.xlu0 %563
        %v567 = vsel %vm553, %v559, 0
        %569 = vmatprep.subr.mxu0 0.0
        %570 = vmatpush1.msra.mxu0 %v564
        %571 = vmatprep.subr.mxu0 0.0
        %572 = vmatpush1.msra.mxu0 0.0
        %573 = vmatprep.subr.mxu0 0.0
        %574 = vmatpush1.msra.mxu0 0.0
        %575 = vmatprep.subr.mxu0 0.0
        %576 = vmatpush1.msra.mxu0 0.0
        %577 = vmatprep.subr.mxu0 0.0
        %578 = vmatpush1.msra.mxu0 0.0
        %579 = vmatprep.subr.mxu0 0.0
        %580 = vmatpush1.msra.mxu0 0.0
        %581 = vmatprep.subr.mxu0 0.0
        %582 = vmatpush1.msra.mxu0 0.0
        %583 = vmatprep.subr.mxu0 0.0
        %584 = vmatpush1.msra.mxu0 0.0
        %585 = vmatprep.subr.mxu0 0.0
        %586 = vmatpush1.msra.mxu0 0.0
        %587 = vmatprep.subr.mxu0 0.0
        %588 = vmatpush1.msra.mxu0 0.0
        %589 = vmatprep.subr.mxu0 0.0
        %590 = vmatpush1.msra.mxu0 0.0
        %591 = vmatprep.subr.mxu0 0.0
        %592 = vmatpush1.msra.mxu0 0.0
        %593 = vmatprep.subr.mxu0 0.0
        %594 = vmatpush1.msra.mxu0 0.0
        %595 = vmatprep.subr.mxu0 0.0
        %596 = vmatpush1.msra.mxu0 0.0
        %597 = vmatprep.subr.mxu0 0.0
        %598 = vmatpush1.msra.mxu0 0.0
        %599 = vmatprep.subr.mxu0 0.0
        %600 = vmatpush1.msra.mxu0 0.0
        %601 = vmatprep.subr.mxu0 0.0
        %602 = vmatpush1.msra.mxu0 0.0
        %603 = vmatprep.subr.mxu0 0.0
        %604 = vmatpush1.msra.mxu0 0.0
        %605 = vmatprep.subr.mxu0 0.0
        %606 = vmatpush1.msra.mxu0 0.0
        %607 = vmatprep.subr.mxu0 0.0
        %608 = vmatpush1.msra.mxu0 0.0
        %609 = vmatprep.subr.mxu0 0.0
        %610 = vmatpush1.msra.mxu0 0.0
        %611 = vmatprep.subr.mxu0 0.0
        %612 = vmatpush1.msra.mxu0 0.0
        %613 = vmatprep.subr.mxu0 0.0
        %614 = vmatpush1.msra.mxu0 0.0
        %615 = vmatprep.subr.mxu0 0.0
        %616 = vmatpush1.msra.mxu0 0.0
        %617 = vmatprep.subr.mxu0 0.0
        %618 = vmatpush1.msra.mxu0 0.0
        %619 = vmatprep.subr.mxu0 0.0
        %620 = vmatpush1.msra.mxu0 0.0
        %621 = vmatprep.subr.mxu0 0.0
        %622 = vmatpush1.msra.mxu0 0.0
        %623 = vmatprep.subr.mxu0 0.0
        %624 = vmatpush1.msra.mxu0 0.0
        %625 = vmatprep.subr.mxu0 0.0
        %626 = vmatpush1.msra.mxu0 0.0
        %627 = vmatprep.subr.mxu0 0.0
        %628 = vmatpush1.msra.mxu0 0.0
        %629 = vmatprep.subr.mxu0 0.0
        %630 = vmatpush1.msra.mxu0 0.0
        %631 = vmatprep.subr.mxu0 0.0
        %632 = vmatpush1.msra.mxu0 0.0
        %633 = vmatprep.mubr.f32.mxu0 0.0
        %634 = vmatmul.mubr.f32.gmra.mrb[0].mxu0 %v567
        %v635 = vpop.f32.mrb[0].mxu0
        %v636 = vadd.f32 0.0, %v635
        %v637 = vpop.f32.mrb[0].mxu0
        %638 = vdwg.mxu0
        %v639 = vrcp.pop %v562
        %v640 = vmul.f32 %v636, %v639
        %v641 = vld [vmem:[#allocation5] sm:$0xff]
        %v642 = vld [vmem:[#allocation5 + $0x8] sm:$0xff]
        %v643 = vld [vmem:[#allocation5 + $0x10] sm:$0xff]
        %v644 = vld [vmem:[#allocation5 + $0x18] sm:$0xff]
        %645 = vrot.lane.b32.xlu0 %v472, 32
        %v646 = vpop.permute.xlu0 %645
        %v647 = vsel %vm401, %v646, 0
        %v650 = vsel %vm401, %v474, 0
        %652 = vmatprep.subr.mxu0 0.0
        %653 = vmatpush1.xpose.msra.mxu0 %v650
        %654 = vmatprep.subr.mxu0 0.0
        %655 = vmatpush1.xpose.msra.mxu0 0.0
        %656 = vmatprep.subr.mxu0 0.0
        %657 = vmatpush1.xpose.msra.mxu0 0.0
        %658 = vmatprep.subr.mxu0 0.0
        %659 = vmatpush1.xpose.msra.mxu0 0.0
        %660 = vmatprep.subr.mxu0 0.0
        %661 = vmatpush1.xpose.msra.mxu0 0.0
        %662 = vmatprep.subr.mxu0 0.0
        %663 = vmatpush1.xpose.msra.mxu0 0.0
        %664 = vmatprep.subr.mxu0 0.0
        %665 = vmatpush1.xpose.msra.mxu0 0.0
        %666 = vmatprep.subr.mxu0 0.0
        %667 = vmatpush1.xpose.msra.mxu0 0.0
        %668 = vmatprep.subr.mxu0 0.0
        %669 = vmatpush1.xpose.msra.mxu0 0.0
        %670 = vmatprep.subr.mxu0 0.0
        %671 = vmatpush1.xpose.msra.mxu0 0.0
        %672 = vmatprep.subr.mxu0 0.0
        %673 = vmatpush1.xpose.msra.mxu0 0.0
        %674 = vmatprep.subr.mxu0 0.0
        %675 = vmatpush1.xpose.msra.mxu0 0.0
        %676 = vmatprep.subr.mxu0 0.0
        %677 = vmatpush1.xpose.msra.mxu0 0.0
        %678 = vmatprep.subr.mxu0 0.0
        %679 = vmatpush1.xpose.msra.mxu0 0.0
        %680 = vmatprep.subr.mxu0 0.0
        %681 = vmatpush1.xpose.msra.mxu0 0.0
        %682 = vmatprep.subr.mxu0 0.0
        %683 = vmatpush1.xpose.msra.mxu0 0.0
        %684 = vmatprep.subr.mxu0 0.0
        %685 = vmatpush1.xpose.msra.mxu0 0.0
        %686 = vmatprep.subr.mxu0 0.0
        %687 = vmatpush1.xpose.msra.mxu0 0.0
        %688 = vmatprep.subr.mxu0 0.0
        %689 = vmatpush1.xpose.msra.mxu0 0.0
        %690 = vmatprep.subr.mxu0 0.0
        %691 = vmatpush1.xpose.msra.mxu0 0.0
        %692 = vmatprep.subr.mxu0 0.0
        %693 = vmatpush1.xpose.msra.mxu0 0.0
        %694 = vmatprep.subr.mxu0 0.0
        %695 = vmatpush1.xpose.msra.mxu0 0.0
        %696 = vmatprep.subr.mxu0 0.0
        %697 = vmatpush1.xpose.msra.mxu0 0.0
        %698 = vmatprep.subr.mxu0 0.0
        %699 = vmatpush1.xpose.msra.mxu0 0.0
        %700 = vmatprep.subr.mxu0 0.0
        %701 = vmatpush1.xpose.msra.mxu0 0.0
        %702 = vmatprep.subr.mxu0 0.0
        %703 = vmatpush1.xpose.msra.mxu0 0.0
        %704 = vmatprep.subr.mxu0 0.0
        %705 = vmatpush1.xpose.msra.mxu0 0.0
        %706 = vmatprep.subr.mxu0 0.0
        %707 = vmatpush1.xpose.msra.mxu0 0.0
        %708 = vmatprep.subr.mxu0 0.0
        %709 = vmatpush1.xpose.msra.mxu0 0.0
        %710 = vmatprep.subr.mxu0 0.0
        %711 = vmatpush1.xpose.msra.mxu0 0.0
        %712 = vmatprep.subr.mxu0 0.0
        %713 = vmatpush1.xpose.msra.mxu0 0.0
        %714 = vmatprep.subr.mxu0 0.0
        %715 = vmatpush1.xpose.msra.mxu0 0.0
        %716 = vmatprep.mubr.f32.mxu0 0.0
        %717 = vmatmul.mubr.f32.gmra.mrb[0].mxu0 %v647
        %v718 = vpop.f32.mrb[0].mxu0
        %v719 = vadd.f32 0.0, %v718
        %v720 = vpop.f32.mrb[0].mxu0
        %721 = vdwg.mxu0
        %v722 = vsel %vm553, %v719, -inf
        %723 = vmax.xlane.f32.xlu0 %v722
        %v724 = vpop.xlane.xlu0 %723
        %v725 = vsub.f32 %v719, %v724
        %v726 = vmul.f32 %v725, 1.442695
        %v727 = vpow.pop %v726
        %v728 = vsel %vm553, %v727, 0.0
        %729 = vadd.xlane.f32.xlu0 %v728
        %v730 = vpop.xlane.xlu0 %729
        %731 = vrot.lane.b32.xlu0 %v474, 96
        %v732 = vpop.permute.xlu0 %731
        %v735 = vsel %vm553, %v727, 0
        %737 = vmatprep.subr.mxu0 0.0
        %738 = vmatpush1.msra.mxu0 %v732
        %739 = vmatprep.subr.mxu0 0.0
        %740 = vmatpush1.msra.mxu0 0.0
        %741 = vmatprep.subr.mxu0 0.0
        %742 = vmatpush1.msra.mxu0 0.0
        %743 = vmatprep.subr.mxu0 0.0
        %744 = vmatpush1.msra.mxu0 0.0
        %745 = vmatprep.subr.mxu0 0.0
        %746 = vmatpush1.msra.mxu0 0.0
        %747 = vmatprep.subr.mxu0 0.0
        %748 = vmatpush1.msra.mxu0 0.0
        %749 = vmatprep.subr.mxu0 0.0
        %750 = vmatpush1.msra.mxu0 0.0
        %751 = vmatprep.subr.mxu0 0.0
        %752 = vmatpush1.msra.mxu0 0.0
        %753 = vmatprep.subr.mxu0 0.0
        %754 = vmatpush1.msra.mxu0 0.0
        %755 = vmatprep.subr.mxu0 0.0
        %756 = vmatpush1.msra.mxu0 0.0
        %757 = vmatprep.subr.mxu0 0.0
        %758 = vmatpush1.msra.mxu0 0.0
        %759 = vmatprep.subr.mxu0 0.0
        %760 = vmatpush1.msra.mxu0 0.0
        %761 = vmatprep.subr.mxu0 0.0
        %762 = vmatpush1.msra.mxu0 0.0
        %763 = vmatprep.subr.mxu0 0.0
        %764 = vmatpush1.msra.mxu0 0.0
        %765 = vmatprep.subr.mxu0 0.0
        %766 = vmatpush1.msra.mxu0 0.0
        %767 = vmatprep.subr.mxu0 0.0
        %768 = vmatpush1.msra.mxu0 0.0
        %769 = vmatprep.subr.mxu0 0.0
        %770 = vmatpush1.msra.mxu0 0.0
        %771 = vmatprep.subr.mxu0 0.0
        %772 = vmatpush1.msra.mxu0 0.0
        %773 = vmatprep.subr.mxu0 0.0
        %774 = vmatpush1.msra.mxu0 0.0
        %775 = vmatprep.subr.mxu0 0.0
        %776 = vmatpush1.msra.mxu0 0.0
        %777 = vmatprep.subr.mxu0 0.0
        %778 = vmatpush1.msra.mxu0 0.0
        %779 = vmatprep.subr.mxu0 0.0
        %780 = vmatpush1.msra.mxu0 0.0
        %781 = vmatprep.subr.mxu0 0.0
        %782 = vmatpush1.msra.mxu0 0.0
        %783 = vmatprep.subr.mxu0 0.0
        %784 = vmatpush1.msra.mxu0 0.0
        %785 = vmatprep.subr.mxu0 0.0
        %786 = vmatpush1.msra.mxu0 0.0
        %787 = vmatprep.subr.mxu0 0.0
        %788 = vmatpush1.msra.mxu0 0.0
        %789 = vmatprep.subr.mxu0 0.0
        %790 = vmatpush1.msra.mxu0 0.0
        %791 = vmatprep.subr.mxu0 0.0
        %792 = vmatpush1.msra.mxu0 0.0
        %793 = vmatprep.subr.mxu0 0.0
        %794 = vmatpush1.msra.mxu0 0.0
        %795 = vmatprep.subr.mxu0 0.0
        %796 = vmatpush1.msra.mxu0 0.0
        %797 = vmatprep.subr.mxu0 0.0
        %798 = vmatpush1.msra.mxu0 0.0
        %799 = vmatprep.subr.mxu0 0.0
        %800 = vmatpush1.msra.mxu0 0.0
        %801 = vmatprep.mubr.f32.mxu0 0.0
        %802 = vmatmul.mubr.f32.gmra.mrb[0].mxu0 %v735
        %v803 = vpop.f32.mrb[0].mxu0
        %v804 = vadd.f32 0.0, %v803
        %v805 = vpop.f32.mrb[0].mxu0
        %806 = vdwg.mxu0
        %v807 = vrcp.pop %v730
        %v808 = vmul.f32 %v804, %v807
        %s809 = scalar_lea.vmem [#allocation5], 32
        %v810 = vld [vmem:[%s809] sm:$0xff]
        %v811 = vld [vmem:[%s809 + $0x8] sm:$0xff]
        %v812 = vld [vmem:[%s809 + $0x10] sm:$0xff]
        %v813 = vld [vmem:[%s809 + $0x18] sm:$0xff]
        %v815 = vsel %vm401, %v808, 0
        %817 = vmatprep.subr.mxu0 0.0
        %818 = vmatpush1.msra.mxu0 %v810
        %819 = vmatprep.subr.mxu0 0.0
        %820 = vmatpush1.msra.mxu0 %v811
        %821 = vmatprep.subr.mxu0 0.0
        %822 = vmatpush1.msra.mxu0 %v812
        %823 = vmatprep.subr.mxu0 0.0
        %824 = vmatpush1.msra.mxu0 %v813
        %825 = vmatprep.subr.mxu0 0.0
        %826 = vmatpush1.msra.mxu0 0.0
        %827 = vmatprep.subr.mxu0 0.0
        %828 = vmatpush1.msra.mxu0 0.0
        %829 = vmatprep.subr.mxu0 0.0
        %830 = vmatpush1.msra.mxu0 0.0
        %831 = vmatprep.subr.mxu0 0.0
        %832 = vmatpush1.msra.mxu0 0.0
        %833 = vmatprep.subr.mxu0 0.0
        %834 = vmatpush1.msra.mxu0 0.0
        %835 = vmatprep.subr.mxu0 0.0
        %836 = vmatpush1.msra.mxu0 0.0
        %837 = vmatprep.subr.mxu0 0.0
        %838 = vmatpush1.msra.mxu0 0.0
        %839 = vmatprep.subr.mxu0 0.0
        %840 = vmatpush1.msra.mxu0 0.0
        %841 = vmatprep.subr.mxu0 0.0
        %842 = vmatpush1.msra.mxu0 0.0
        %843 = vmatprep.subr.mxu0 0.0
        %844 = vmatpush1.msra.mxu0 0.0
        %845 = vmatprep.subr.mxu0 0.0
        %846 = vmatpush1.msra.mxu0 0.0
        %847 = vmatprep.subr.mxu0 0.0
        %848 = vmatpush1.msra.mxu0 0.0
        %849 = vmatprep.subr.mxu0 0.0
        %850 = vmatpush1.msra.mxu0 0.0
        %851 = vmatprep.subr.mxu0 0.0
        %852 = vmatpush1.msra.mxu0 0.0
        %853 = vmatprep.subr.mxu0 0.0
        %854 = vmatpush1.msra.mxu0 0.0
        %855 = vmatprep.subr.mxu0 0.0
        %856 = vmatpush1.msra.mxu0 0.0
        %857 = vmatprep.subr.mxu0 0.0
        %858 = vmatpush1.msra.mxu0 0.0
        %859 = vmatprep.subr.mxu0 0.0
        %860 = vmatpush1.msra.mxu0 0.0
        %861 = vmatprep.subr.mxu0 0.0
        %862 = vmatpush1.msra.mxu0 0.0
        %863 = vmatprep.subr.mxu0 0.0
        %864 = vmatpush1.msra.mxu0 0.0
        %865 = vmatprep.subr.mxu0 0.0
        %866 = vmatpush1.msra.mxu0 0.0
        %867 = vmatprep.subr.mxu0 0.0
        %868 = vmatpush1.msra.mxu0 0.0
        %869 = vmatprep.subr.mxu0 0.0
        %870 = vmatpush1.msra.mxu0 0.0
        %871 = vmatprep.subr.mxu0 0.0
        %872 = vmatpush1.msra.mxu0 0.0
        %873 = vmatprep.subr.mxu0 0.0
        %874 = vmatpush1.msra.mxu0 0.0
        %875 = vmatprep.subr.mxu0 0.0
        %876 = vmatpush1.msra.mxu0 0.0
        %877 = vmatprep.subr.mxu0 0.0
        %878 = vmatpush1.msra.mxu0 0.0
        %879 = vmatprep.subr.mxu0 0.0
        %880 = vmatpush1.msra.mxu0 0.0
        %881 = vmatprep.mubr.f32.mxu0 0.0
        %882 = vmatmul.mubr.f32.gmra.mrb[0].mxu0 %v815
        %v883 = vpop.f32.mrb[0].mxu0
        %v884 = vadd.f32 0.0, %v883
        %v885 = vpop.f32.mrb[0].mxu0
        %886 = vdwg.mxu0
        %v888 = vsel %vm401, %v640, 0
        %890 = vmatprep.subr.mxu0 0.0
        %891 = vmatpush1.msra.mxu0 %v641
        %892 = vmatprep.subr.mxu0 0.0
        %893 = vmatpush1.msra.mxu0 %v642
        %894 = vmatprep.subr.mxu0 0.0
        %895 = vmatpush1.msra.mxu0 %v643
        %896 = vmatprep.subr.mxu0 0.0
        %897 = vmatpush1.msra.mxu0 %v644
        %898 = vmatprep.subr.mxu0 0.0
        %899 = vmatpush1.msra.mxu0 0.0
        %900 = vmatprep.subr.mxu0 0.0
        %901 = vmatpush1.msra.mxu0 0.0
        %902 = vmatprep.subr.mxu0 0.0
        %903 = vmatpush1.msra.mxu0 0.0
        %904 = vmatprep.subr.mxu0 0.0
        %905 = vmatpush1.msra.mxu0 0.0
        %906 = vmatprep.subr.mxu0 0.0
        %907 = vmatpush1.msra.mxu0 0.0
        %908 = vmatprep.subr.mxu0 0.0
        %909 = vmatpush1.msra.mxu0 0.0
        %910 = vmatprep.subr.mxu0 0.0
        %911 = vmatpush1.msra.mxu0 0.0
        %912 = vmatprep.subr.mxu0 0.0
        %913 = vmatpush1.msra.mxu0 0.0
        %914 = vmatprep.subr.mxu0 0.0
        %915 = vmatpush1.msra.mxu0 0.0
        %916 = vmatprep.subr.mxu0 0.0
        %917 = vmatpush1.msra.mxu0 0.0
        %918 = vmatprep.subr.mxu0 0.0
        %919 = vmatpush1.msra.mxu0 0.0
        %920 = vmatprep.subr.mxu0 0.0
        %921 = vmatpush1.msra.mxu0 0.0
        %922 = vmatprep.subr.mxu0 0.0
        %923 = vmatpush1.msra.mxu0 0.0
        %924 = vmatprep.subr.mxu0 0.0
        %925 = vmatpush1.msra.mxu0 0.0
        %926 = vmatprep.subr.mxu0 0.0
        %927 = vmatpush1.msra.mxu0 0.0
        %928 = vmatprep.subr.mxu0 0.0
        %929 = vmatpush1.msra.mxu0 0.0
        %930 = vmatprep.subr.mxu0 0.0
        %931 = vmatpush1.msra.mxu0 0.0
        %932 = vmatprep.subr.mxu0 0.0
        %933 = vmatpush1.msra.mxu0 0.0
        %934 = vmatprep.subr.mxu0 0.0
        %935 = vmatpush1.msra.mxu0 0.0
        %936 = vmatprep.subr.mxu0 0.0
        %937 = vmatpush1.msra.mxu0 0.0
        %938 = vmatprep.subr.mxu0 0.0
        %939 = vmatpush1.msra.mxu0 0.0
        %940 = vmatprep.subr.mxu0 0.0
        %941 = vmatpush1.msra.mxu0 0.0
        %942 = vmatprep.subr.mxu0 0.0
        %943 = vmatpush1.msra.mxu0 0.0
        %944 = vmatprep.subr.mxu0 0.0
        %945 = vmatpush1.msra.mxu0 0.0
        %946 = vmatprep.subr.mxu0 0.0
        %947 = vmatpush1.msra.mxu0 0.0
        %948 = vmatprep.subr.mxu0 0.0
        %949 = vmatpush1.msra.mxu0 0.0
        %950 = vmatprep.subr.mxu0 0.0
        %951 = vmatpush1.msra.mxu0 0.0
        %952 = vmatprep.subr.mxu0 0.0
        %953 = vmatpush1.msra.mxu0 0.0
        %954 = vmatprep.mubr.f32.mxu0 0.0
        %955 = vmatmul.mubr.f32.gmra.mrb[0].mxu0 %v888
        %v956 = vpop.f32.mrb[0].mxu0
        %v957 = vadd.f32 %v884, %v956
        %v958 = vpop.f32.mrb[0].mxu0
        %959 = vdwg.mxu0
        %v960 = vld [vmem:[%s3] sm:$0x1]
        %v962 = vlaneseq
        %v963 = vshrl.u32 %v962, 7
        %v964 = vsub.s32 0, %v963
        %v965 = vrot.slane %v960, %v964
        %v967 = vadd.f32 %v957, %v965
        %v968 = vadd.f32 %v390, %v967
        %v969 = vsel %vm401, %v968, 0.0
        %970 = vadd.xlane.f32.xlu0 %v969
        %v971 = vpop.xlane.xlu0 %970
        %v972 = vrcp.pop 32.0
        %v973 = vmul.f32 %v971, %v972
        %v974 = vsub.f32 %v968, %v973
        %v975 = vmul.f32 %v974, %v974
        %v976 = vsel %vm401, %v975, 0.0
        %977 = vadd.xlane.f32.xlu0 %v976
        %v978 = vpop.xlane.xlu0 %977
        %v979 = vmul.f32 %v978, %v972
        %v980 = vadd.f32 %v979, 1e-05
        %v981 = vrsqrt.pop %v980
        %v982 = vmul.f32 %v974, %v981
        %v984 = vlaneseq
        %v985 = vshrl.u32 %v984, 7
        %v986 = vsub.s32 0, %v985
        %v987 = vrot.slane %v391, %v986
        %v989 = vmul.f32 %v982, %v987
        %v991 = vlaneseq
        %v992 = vshrl.u32 %v991, 7
        %v993 = vsub.s32 0, %v992
        %v994 = vrot.slane %v392, %v993
        %v996 = vadd.f32 %v989, %v994
        %v997 = vld [vmem:[%s6] sm:$0xff]
        %v998 = vld [vmem:[%s6 + $0x8] sm:$0xff]
        %v999 = vld [vmem:[%s6 + $0x10] sm:$0xff]
        %v1000 = vld [vmem:[%s6 + $0x18] sm:$0xff]
        %v1001 = vld [vmem:[%s7] sm:$0x1]
        %v1003 = vlaneseq
        %v1004 = vshrl.u32 %v1003, 7
        %v1005 = vsub.s32 0, %v1004
        %v1006 = vrot.slane %v1001, %v1005
        %v1009 = vsel %vm401, %v996, 0
        %1011 = vmatprep.subr.mxu0 0.0
        %1012 = vmatpush1.msra.mxu0 %v997
        %1013 = vmatprep.subr.mxu0 0.0
        %1014 = vmatpush1.msra.mxu0 %v998
        %1015 = vmatprep.subr.mxu0 0.0
        %1016 = vmatpush1.msra.mxu0 %v999
        %1017 = vmatprep.subr.mxu0 0.0
        %1018 = vmatpush1.msra.mxu0 %v1000
        %1019 = vmatprep.subr.mxu0 0.0
        %1020 = vmatpush1.msra.mxu0 0.0
        %1021 = vmatprep.subr.mxu0 0.0
        %1022 = vmatpush1.msra.mxu0 0.0
        %1023 = vmatprep.subr.mxu0 0.0
        %1024 = vmatpush1.msra.mxu0 0.0
        %1025 = vmatprep.subr.mxu0 0.0
        %1026 = vmatpush1.msra.mxu0 0.0
        %1027 = vmatprep.subr.mxu0 0.0
        %1028 = vmatpush1.msra.mxu0 0.0
        %1029 = vmatprep.subr.mxu0 0.0
        %1030 = vmatpush1.msra.mxu0 0.0
        %1031 = vmatprep.subr.mxu0 0.0
        %1032 = vmatpush1.msra.mxu0 0.0
        %1033 = vmatprep.subr.mxu0 0.0
        %1034 = vmatpush1.msra.mxu0 0.0
        %1035 = vmatprep.subr.mxu0 0.0
        %1036 = vmatpush1.msra.mxu0 0.0
        %1037 = vmatprep.subr.mxu0 0.0
        %1038 = vmatpush1.msra.mxu0 0.0
        %1039 = vmatprep.subr.mxu0 0.0
        %1040 = vmatpush1.msra.mxu0 0.0
        %1041 = vmatprep.subr.mxu0 0.0
        %1042 = vmatpush1.msra.mxu0 0.0
        %1043 = vmatprep.subr.mxu0 0.0
        %1044 = vmatpush1.msra.mxu0 0.0
        %1045 = vmatprep.subr.mxu0 0.0
        %1046 = vmatpush1.msra.mxu0 0.0
        %1047 = vmatprep.subr.mxu0 0.0
        %1048 = vmatpush1.msra.mxu0 0.0
        %1049 = vmatprep.subr.mxu0 0.0
        %1050 = vmatpush1.msra.mxu0 0.0
        %1051 = vmatprep.subr.mxu0 0.0
        %1052 = vmatpush1.msra.mxu0 0.0
        %1053 = vmatprep.subr.mxu0 0.0
        %1054 = vmatpush1.msra.mxu0 0.0
        %1055 = vmatprep.subr.mxu0 0.0
        %1056 = vmatpush1.msra.mxu0 0.0
        %1057 = vmatprep.subr.mxu0 0.0
        %1058 = vmatpush1.msra.mxu0 0.0
        %1059 = vmatprep.subr.mxu0 0.0
        %1060 = vmatpush1.msra.mxu0 0.0
        %1061 = vmatprep.subr.mxu0 0.0
        %1062 = vmatpush1.msra.mxu0 0.0
        %1063 = vmatprep.subr.mxu0 0.0
        %1064 = vmatpush1.msra.mxu0 0.0
        %1065 = vmatprep.subr.mxu0 0.0
        %1066 = vmatpush1.msra.mxu0 0.0
        %1067 = vmatprep.subr.mxu0 0.0
        %1068 = vmatpush1.msra.mxu0 0.0
        %1069 = vmatprep.subr.mxu0 0.0
        %1070 = vmatpush1.msra.mxu0 0.0
        %1071 = vmatprep.subr.mxu0 0.0
        %1072 = vmatpush1.msra.mxu0 0.0
        %1073 = vmatprep.subr.mxu0 0.0
        %1074 = vmatpush1.msra.mxu0 0.0
        %1075 = vmatprep.mubr.f32.mxu0 0.0
        %1076 = vmatmul.mubr.f32.gmra.mrb[0].mxu0 %v1009
        %v1077 = vpop.f32.mrb[0].mxu0
        %v1078 = vadd.f32 %v1006, %v1077
        %v1079 = vpop.f32.mrb[0].mxu0
        %1080 = vdwg.mxu0
        %v1081 = vmul.f32 %v1078, 0.5
        %v1082 = vmul.f32 %v1078, 0.70710677
        %v1083 = vand.u32 2147483647, %v1082
        %v1084 = vmul.f32 %v1083, 0.3275911
        %v1085 = vadd.f32 %v1084, 1.0
        %v1086 = vrcp.pop %v1085
        %v1087 = vmul.f32 1.0, %v1086
        %v1088 = vmul.f32 %v1087, 1.0614054
        %v1089 = vadd.f32 %v1088, -1.4531521
        %v1090 = vmul.f32 %v1089, %v1087
        %v1091 = vadd.f32 %v1090, 1.4214138
        %v1092 = vmul.f32 %v1091, %v1087
        %v1093 = vadd.f32 %v1092, -0.28449672
        %v1094 = vmul.f32 %v1093, %v1087
        %v1095 = vadd.f32 %v1094, 0.2548296
        %v1096 = vmul.f32 %v1095, %v1087
        %v1097 = vsub.f32 0.0, %v1083
        %v1098 = vmul.f32 %v1097, %v1083
        %v1099 = vmul.f32 %v1098, 1.442695
        %v1100 = vpow.pop %v1099
        %v1101 = vmul.f32 %v1096, %v1100
        %v1102 = vsub.f32 1.0, %v1101
        %vm1103 = vcmp.lt.f32.partialorder %v1082, 0.0
        %v1104 = vsub.f32 0.0, %v1102
        %v1105 = vsel %vm1103, %v1104, %v1102
        %v1106 = vadd.f32 %v1105, 1.0
        %v1107 = vmul.f32 %v1081, %v1106
        %v1108 = vld [vmem:[%s8] sm:$0xff]
        %v1109 = vld [vmem:[%s8 + $0x8] sm:$0xff]
        %v1110 = vld [vmem:[%s8 + $0x10] sm:$0xff]
        %v1111 = vld [vmem:[%s8 + $0x18] sm:$0xff]
        %v1112 = vld [vmem:[%s8 + $0x20] sm:$0xff]
        %v1113 = vld [vmem:[%s8 + $0x28] sm:$0xff]
        %v1114 = vld [vmem:[%s8 + $0x30] sm:$0xff]
        %v1115 = vld [vmem:[%s8 + $0x38] sm:$0xff]
        %v1116 = vld [vmem:[%s9] sm:$0x1]
        %v1118 = vlaneseq
        %v1119 = vshrl.u32 %v1118, 7
        %v1120 = vsub.s32 0, %v1119
        %v1121 = vrot.slane %v1116, %v1120
        %vm1123 = vcmask 523264
        %v1125 = vsel %vm1123, %v1107, 0
        %1127 = vmatprep.subr.mxu0 0.0
        %1128 = vmatpush1.msra.mxu0 %v1108
        %1129 = vmatprep.subr.mxu0 0.0
        %1130 = vmatpush1.msra.mxu0 %v1109
        %1131 = vmatprep.subr.mxu0 0.0
        %1132 = vmatpush1.msra.mxu0 %v1110
        %1133 = vmatprep.subr.mxu0 0.0
        %1134 = vmatpush1.msra.mxu0 %v1111
        %1135 = vmatprep.subr.mxu0 0.0
        %1136 = vmatpush1.msra.mxu0 %v1112
        %1137 = vmatprep.subr.mxu0 0.0
        %1138 = vmatpush1.msra.mxu0 %v1113
        %1139 = vmatprep.subr.mxu0 0.0
        %1140 = vmatpush1.msra.mxu0 %v1114
        %1141 = vmatprep.subr.mxu0 0.0
        %1142 = vmatpush1.msra.mxu0 %v1115
        %1143 = vmatprep.subr.mxu0 0.0
        %1144 = vmatpush1.msra.mxu0 0.0
        %1145 = vmatprep.subr.mxu0 0.0
        %1146 = vmatpush1.msra.mxu0 0.0
        %1147 = vmatprep.subr.mxu0 0.0
        %1148 = vmatpush1.msra.mxu0 0.0
        %1149 = vmatprep.subr.mxu0 0.0
        %1150 = vmatpush1.msra.mxu0 0.0
        %1151 = vmatprep.subr.mxu0 0.0
        %1152 = vmatpush1.msra.mxu0 0.0
        %1153 = vmatprep.subr.mxu0 0.0
        %1154 = vmatpush1.msra.mxu0 0.0
        %1155 = vmatprep.subr.mxu0 0.0
        %1156 = vmatpush1.msra.mxu0 0.0
        %1157 = vmatprep.subr.mxu0 0.0
        %1158 = vmatpush1.msra.mxu0 0.0
        %1159 = vmatprep.subr.mxu0 0.0
        %1160 = vmatpush1.msra.mxu0 0.0
        %1161 = vmatprep.subr.mxu0 0.0
        %1162 = vmatpush1.msra.mxu0 0.0
        %1163 = vmatprep.subr.mxu0 0.0
        %1164 = vmatpush1.msra.mxu0 0.0
        %1165 = vmatprep.subr.mxu0 0.0
        %1166 = vmatpush1.msra.mxu0 0.0
        %1167 = vmatprep.subr.mxu0 0.0
        %1168 = vmatpush1.msra.mxu0 0.0
        %1169 = vmatprep.subr.mxu0 0.0
        %1170 = vmatpush1.msra.mxu0 0.0
        %1171 = vmatprep.subr.mxu0 0.0
        %1172 = vmatpush1.msra.mxu0 0.0
        %1173 = vmatprep.subr.mxu0 0.0
        %1174 = vmatpush1.msra.mxu0 0.0
        %1175 = vmatprep.subr.mxu0 0.0
        %1176 = vmatpush1.msra.mxu0 0.0
        %1177 = vmatprep.subr.mxu0 0.0
        %1178 = vmatpush1.msra.mxu0 0.0
        %1179 = vmatprep.subr.mxu0 0.0
        %1180 = vmatpush1.msra.mxu0 0.0
        %1181 = vmatprep.subr.mxu0 0.0
        %1182 = vmatpush1.msra.mxu0 0.0
        %1183 = vmatprep.subr.mxu0 0.0
        %1184 = vmatpush1.msra.mxu0 0.0
        %1185 = vmatprep.subr.mxu0 0.0
        %1186 = vmatpush1.msra.mxu0 0.0
        %1187 = vmatprep.subr.mxu0 0.0
        %1188 = vmatpush1.msra.mxu0 0.0
        %1189 = vmatprep.subr.mxu0 0.0
        %1190 = vmatpush1.msra.mxu0 0.0
        %1191 = vmatprep.mubr.f32.mxu0 0.0
        %1192 = vmatmul.mubr.f32.gmra.mrb[0].mxu0 %v1125
        %v1193 = vpop.f32.mrb[0].mxu0
        %v1194 = vadd.f32 %v1121, %v1193
        %v1195 = vpop.f32.mrb[0].mxu0
        %1196 = vdwg.mxu0
        %v1197 = vadd.f32 %v996, %v1194
        %v1198 = vsel %vm401, %v1197, 0.0
        %1199 = vadd.xlane.f32.xlu0 %v1198
        %v1200 = vpop.xlane.xlu0 %1199
        %v1201 = vmul.f32 %v1200, %v972
        %v1202 = vsub.f32 %v1197, %v1201
        %v1203 = vmul.f32 %v1202, %v1202
        %v1204 = vsel %vm401, %v1203, 0.0
        %1205 = vadd.xlane.f32.xlu0 %v1204
        %v1206 = vpop.xlane.xlu0 %1205
        %v1207 = vmul.f32 %v1206, %v972
        %v1208 = vadd.f32 %v1207, 1e-05
        %v1209 = vrsqrt.pop %v1208
        %v1210 = vmul.f32 %v1202, %v1209
        %v1211 = vmul.f32 %v1210, %v987
        %v1212 = vadd.f32 %v1211, %v994
        %1213 = vst.msk [vmem:[%s389] sm:$0xff] %vm401, %v1212
        %s1214 = sand.u32 %s251, 1
        %s1215 = scalar_lea.sflag [#allocation4], %s1214
        %s1216 = sand.u32 %s251, 1
        %s1217 = smul.addr %s1216, 8
        %s1218 = scalar_lea.vmem [#allocation7], %s1217
        // Predicated region
        $region69: #{tpu_custom_call.1} parent=59 // pred_check
          %p1219 = pneg %p261
        $region70: #{tpu_custom_call.1} parent=59 // pred_check_branch
          %1221 = sbr.rel (%p1219) target = $region72
        $region71: #{tpu_custom_call.1} parent=59 // pred_region
          %s1223 = ssub.s32 128, 128
          %1224 = vsyncadd %s1215, %s1223
          %s1225 = smul.addr %s28, 128
          %s1226 = scalar_lea.hbm %s10, %s1225
          %s1228 = sshll.u32 %s1218, 4
          %s1229 = int_to_ptr.vmem [resolvable:$true] %s1228
          %1231 = dma.vmem_to_hbm [thread:$0]  %s1229, 128, %s1226, %s1215
        $region72: #{tpu_custom_call.1} parent=59 // pred_fallthru
          _
      $region60: #{tpu_custom_call.1} parent=5 // pred_fallthru
        _
      %p1232 = scmp.le.s32.totalorder 2, %s23
      // Predicated region
      $region73: #{tpu_custom_call.1} parent=5 // pred_check
        %p1233 = pneg %p1232
      $region74: #{tpu_custom_call.1} parent=5 // pred_check_branch
        %1235 = sbr.rel (%p1233) target = $region76
      $region75: #{tpu_custom_call.1} parent=5 // pred_region
        %s1236 = ssub.s32 %s23, 2
        // Predicated region
        $region77: #{tpu_custom_call.1} parent=75 // pred_check
          %p1237 = pneg %p267
        $region78: #{tpu_custom_call.1} parent=75 // pred_check_branch
          %1239 = sbr.rel (%p1237) target = $region80
        $region79: #{tpu_custom_call.1} parent=75 // pred_region
          %s1240 = sand.u32 %s252, 1
          %s1241 = scalar_lea.sflag [#allocation4], %s1240
          %s1242 = sand.u32 %s252, 1
          %s1243 = smul.addr %s1242, 8
          %s1244 = scalar_lea.vmem [#allocation7], %s1243
          %1245 = dma.done %s1241, 128
        $region80: #{tpu_custom_call.1} parent=75 // pred_fallthru
          _
      $region76: #{tpu_custom_call.1} parent=5 // pred_fallthru
        _
    $region6: #{tpu_custom_call.1} parent=1 // loop_footer
      %s27 = sadd.s32 1, %s23
    $region7: #{tpu_custom_call.1} parent=1 // loop_footer_branch
      %22 = sbr.rel target = $region3
    $region8: #{tpu_custom_call.1} parent=1 // loop_exit
      _
    %1246 = vsyncpa [#allocation3], 1
    %s1247 = scalar_lea.sflag [#allocation3], 1
    %1248 = vsyncpa %s1247, 1
    %1249 = vsyncpa [#allocation6], 1
    %1250 = vsyncpa [#allocation4], 1
    %s1251 = scalar_lea.sflag [#allocation4], 1
    %1252 = vsyncpa %s1251, 1

</llo_original>
